<compile_context>
chip_gen: v5e
topology: v5e:2x2
jax: 0.10.0
libtpu: 0.0.40
codegen_flags: <defaults>
</compile_context>

<pallas_src>
import jax
import jax.numpy as jnp
from jax.experimental import pallas as pl
from jax.experimental.pallas import tpu as pltpu

# Padded layer output widths (original 300 / 300 / 200 / 1).
_H1, _H2, _H3, _H4 = 384, 384, 256, 8

_MAX_TILE_BLOCKS = 16          # batch tile cap = 16 * 128 = 2048 rows


def _round_up(x, m):
    return ((x + m - 1) // m) * m


def _cdiv(a, b):
    return (a + b - 1) // b


def _mlp_kernel(x_ref,
                w1_ref, b1_ref,
                w2_ref, b2_ref,
                w3_ref, b3_ref,
                w4_ref, b4_ref,
                o_ref):
    """Fused 4-layer MLP, transposed layout (batch on lanes).

    x_ref  : (inp_pad, bt) bf16   -- x^T tile
    w{n}   : bf16, native PyTorch (out, in) layout, zero padded
    b{1..3}: f32 (H_pad, 1);  b4: f32 (1, 1)
    o_ref  : (1, bt) f32          -- lane-dense sigmoid row
    """
    xT = x_ref[...]                                                     # bf16

    h = jnp.dot(w1_ref[...], xT, preferred_element_type=jnp.float32) + b1_ref[...]
    h = jnp.maximum(h, 0.0).astype(jnp.bfloat16)                        # (H1, bt)

    h = jnp.dot(w2_ref[...], h, preferred_element_type=jnp.float32) + b2_ref[...]
    h = jnp.maximum(h, 0.0).astype(jnp.bfloat16)                        # (H2, bt)

    h = jnp.dot(w3_ref[...], h, preferred_element_type=jnp.float32) + b3_ref[...]
    h = jnp.maximum(h, 0.0).astype(jnp.bfloat16)                        # (H3, bt)

    z = jnp.dot(w4_ref[...], h, preferred_element_type=jnp.float32)     # (8, bt)
    z0 = z[0:1, :] + b4_ref[...]                                        # (1, bt)
    o_ref[...] = jax.nn.sigmoid(z0).astype(o_ref.dtype)


def _choose_batch_tiling(B):
    """Pick (batch_tile, num_tiles, B_pad).

    Tiles are multiples of 128 rows, capped at 2048; prefer >= 2 grid steps
    (v7x dual-TC sharding) when the batch spans >= 2 lane blocks; minimize a
    cost proxy of padded-compute blocks + per-step pipeline overhead so
    padding waste stays bounded to a few 128-row blocks.
    """
    n128 = _cdiv(max(B, 1), 128)
    min_tiles = max(2 if n128 >= 2 else 1, _cdiv(n128, _MAX_TILE_BLOCKS))
    best = None
    for t in range(min_tiles, min(n128, min_tiles + 8) + 1):
        bt_blocks = _cdiv(n128, t)
        cost = t * bt_blocks + t          # padded blocks + per-step overhead
        if best is None or cost < best[0]:
            best = (cost, t, bt_blocks)
    _, num_tiles, bt_blocks = best
    batch_tile = 128 * bt_blocks
    return batch_tile, num_tiles, batch_tile * num_tiles


def discriminator_forward(x, params, *, batch_tile=None):
    """Run the Discriminator MLP via a single fused Pallas kernel.

    x      : (B, inp) float32
    params : dict with PyTorch-layout weights w{n}: (out, in) and biases
             b{n}: (out,), all float32.
    Returns (B, 1) float32 probabilities.
    """
    B, inp = x.shape
    inp_pad = _round_up(inp, 128)

    if batch_tile is None:
        batch_tile, num_tiles, B_pad = _choose_batch_tiling(B)
    else:
        assert batch_tile % 128 == 0
        num_tiles = _cdiv(max(B, 1), batch_tile)
        B_pad = batch_tile * num_tiles

    # ---- pad + cast (zero padding preserves the math) -----------------------
    xT = jnp.pad(x.astype(jnp.bfloat16),
                 ((0, B_pad - B), (0, inp_pad - inp))).T      # (inp_pad, B_pad)

    def pad_w(w, rows, cols):
        return jnp.pad(w.astype(jnp.bfloat16),
                       ((0, rows - w.shape[0]), (0, cols - w.shape[1])))

    def pad_b(b, rows):
        return jnp.pad(b.astype(jnp.float32).reshape(-1, 1),
                       ((0, rows - b.shape[-1]), (0, 0)))

    w1 = pad_w(params["w1"], _H1, inp_pad); b1 = pad_b(params["b1"], _H1)
    w2 = pad_w(params["w2"], _H2, _H1);     b2 = pad_b(params["b2"], _H2)
    w3 = pad_w(params["w3"], _H3, _H2);     b3 = pad_b(params["b3"], _H3)
    w4 = pad_w(params["w4"], _H4, _H3)                        # (8, 256), row 0 real
    b4 = params["b4"].astype(jnp.float32).reshape(1, 1)

    full = lambda a: pl.BlockSpec(a.shape, lambda i: (0, 0))

    flops = 2 * B_pad * (inp_pad * _H1 + _H1 * _H2 + _H2 * _H3 + _H3 * _H4)
    bytes_accessed = (xT.size * 2
                      + (w1.size + w2.size + w3.size + w4.size) * 2
                      + (b1.size + b2.size + b3.size + b4.size) * 4
                      + B_pad * 4)

    out = pl.pallas_call(
        _mlp_kernel,
        out_shape=jax.ShapeDtypeStruct((1, B_pad), jnp.float32),
        grid_spec=pltpu.PrefetchScalarGridSpec(
            num_scalar_prefetch=0,
            grid=(num_tiles,),
            in_specs=[
                pl.BlockSpec((inp_pad, batch_tile), lambda i: (0, i)),
                full(w1), full(b1),
                full(w2), full(b2),
                full(w3), full(b3),
                full(w4), full(b4),
            ],
            out_specs=pl.BlockSpec((1, batch_tile), lambda i: (0, i)),
        ),
        compiler_params=pltpu.CompilerParams(
            dimension_semantics=("parallel",),
            vmem_limit_bytes=32 * 1024 * 1024),
        cost_estimate=pl.CostEstimate(
            flops=flops, transcendentals=B_pad, bytes_accessed=bytes_accessed),
    )(xT, w1, b1, w2, b2, w3, b3, w4, b4)

    return out[0, :B].reshape(B, 1)


def init_params(key, inp):
    """Mirror nn.Linear default init: U(-1/sqrt(fan_in), 1/sqrt(fan_in)).

    Weights kept in PyTorch (out_features, in_features) layout; biases (out,).
    """
    dims = [(inp, 300), (300, 300), (300, 200), (200, 1)]
    params = {}
    for n, (fan_in, fan_out) in enumerate(dims, start=1):
        key, kw, kb = jax.random.split(key, 3)
        bound = 1.0 / (fan_in ** 0.5)
        params[f"w{n}"] = jax.random.uniform(
            kw, (fan_out, fan_in), jnp.float32, -bound, bound)
        params[f"b{n}"] = jax.random.uniform(
            kb, (fan_out,), jnp.float32, -bound, bound)
    return params


def _reference(x, p):
    # Pure-JAX reference matching the kernel's quantization points
    # (bf16 matmul operands, f32 accumulation / bias / activations).
    q = lambda a: a.astype(jnp.bfloat16).astype(jnp.float32)
    h = q(x)
    h = q(jnp.maximum(h @ q(p["w1"]).T + p["b1"], 0.0))
    h = q(jnp.maximum(h @ q(p["w2"]).T + p["b2"], 0.0))
    h = q(jnp.maximum(h @ q(p["w3"]).T + p["b3"], 0.0))
    return jax.nn.sigmoid(h @ q(p["w4"]).T + p["b4"])


if __name__ == "__main__":
    key = jax.random.PRNGKey(0)
    inp = 32                     # input feature dimension of the Discriminator
    kx, kp, kx2 = jax.random.split(key, 3)
    params = init_params(kp, inp)

    # Small demo batch (single grid step).
    x_small = jax.random.normal(kx, (8, inp), jnp.float32)
    out_small = jax.block_until_ready(discriminator_forward(x_small, params))
    ref_small = _reference(x_small, params)
    assert out_small.shape == (8, 1)
    assert jnp.allclose(out_small, ref_small, atol=5e-3, rtol=5e-3), (
        f"max abs err = {jnp.max(jnp.abs(out_small - ref_small))}")

    # Larger batch exercising the multi-tile 'parallel' grid path.
    x_big = jax.random.normal(kx2, (300, inp), jnp.float32)
    out_big = jax.block_until_ready(discriminator_forward(x_big, params))
    ref_big = _reference(x_big, params)
    assert out_big.shape == (300, 1)
    assert jnp.allclose(out_big, ref_big, atol=5e-3, rtol=5e-3), (
        f"max abs err = {jnp.max(jnp.abs(out_big - ref_big))}")

    print("KERNEL_OK")
</pallas_src>

<mosaic_0001>
module attributes {stable_mosaic.version = 11 : i64} {
  func.func @_mlp_kernel(%arg0: i32, %arg1: memref<128x128xbf16, #tpu.memory_space<vmem>>, %arg2: memref<384x128xbf16, #tpu.memory_space<vmem>>, %arg3: memref<384x1xf32, #tpu.memory_space<vmem>>, %arg4: memref<384x384xbf16, #tpu.memory_space<vmem>>, %arg5: memref<384x1xf32, #tpu.memory_space<vmem>>, %arg6: memref<256x384xbf16, #tpu.memory_space<vmem>>, %arg7: memref<256x1xf32, #tpu.memory_space<vmem>>, %arg8: memref<8x256xbf16, #tpu.memory_space<vmem>>, %arg9: memref<1x1xf32, #tpu.memory_space<vmem>>, %arg10: memref<1x128xf32, #tpu.memory_space<vmem>>) attributes {dimension_semantics = [#tpu.dimension_semantics<parallel>], iteration_bounds = array<i64: 1>, scalar_prefetch = 0 : i64, scratch_operands = 0 : i64, tpu.core_type = #tpu.core_type<tc>, window_params = [{transform_indices = @transform_0, window_bounds = array<i64: 128, 128>}, {pipeline_mode = #tpu.pipeline_mode<synchronous>, transform_indices = @transform_1, window_bounds = array<i64: 384, 128>}, {pipeline_mode = #tpu.pipeline_mode<synchronous>, transform_indices = @transform_2, window_bounds = array<i64: 384, 1>}, {pipeline_mode = #tpu.pipeline_mode<synchronous>, transform_indices = @transform_3, window_bounds = array<i64: 384, 384>}, {pipeline_mode = #tpu.pipeline_mode<synchronous>, transform_indices = @transform_4, window_bounds = array<i64: 384, 1>}, {pipeline_mode = #tpu.pipeline_mode<synchronous>, transform_indices = @transform_5, window_bounds = array<i64: 256, 384>}, {pipeline_mode = #tpu.pipeline_mode<synchronous>, transform_indices = @transform_6, window_bounds = array<i64: 256, 1>}, {pipeline_mode = #tpu.pipeline_mode<synchronous>, transform_indices = @transform_7, window_bounds = array<i64: 8, 256>}, {pipeline_mode = #tpu.pipeline_mode<synchronous>, transform_indices = @transform_8, window_bounds = array<i64: 1, 1>}, {transform_indices = @transform_9, window_bounds = array<i64: 1, 128>}]} {
    %c0 = arith.constant 0 : index
    %c0_0 = arith.constant 0 : index
    %0 = vector.load %arg1[%c0, %c0_0] : memref<128x128xbf16, #tpu.memory_space<vmem>>, vector<128x128xbf16>
    %c0_1 = arith.constant 0 : index
    %c0_2 = arith.constant 0 : index
    %1 = vector.load %arg2[%c0_1, %c0_2] : memref<384x128xbf16, #tpu.memory_space<vmem>>, vector<384x128xbf16>
    %cst = arith.constant dense<0.000000e+00> : vector<384x128xf32>
    %2 = tpu.matmul %1, %0, %cst {dimension_numbers = #tpu.dot_dimension_numbers<[1], [0], [0], [1], [0, 0, 1, 1], [], []>} : vector<384x128xbf16>, vector<128x128xbf16>, vector<384x128xf32> -> vector<384x128xf32>
    %c0_3 = arith.constant 0 : index
    %c0_4 = arith.constant 0 : index
    %3 = vector.load %arg3[%c0_3, %c0_4] : memref<384x1xf32, #tpu.memory_space<vmem>>, vector<384x1xf32>
    %4 = vector.broadcast %3 : vector<384x1xf32> to vector<384x128xf32>
    %5 = arith.addf %2, %4 : vector<384x128xf32>
    %cst_5 = arith.constant 0.000000e+00 : f32
    %6 = vector.broadcast %cst_5 : f32 to vector<384x128xf32>
    %7 = arith.maximumf %5, %6 : vector<384x128xf32>
    %8 = arith.truncf %7 : vector<384x128xf32> to vector<384x128xbf16>
    %c0_6 = arith.constant 0 : index
    %c0_7 = arith.constant 0 : index
    %9 = vector.load %arg4[%c0_6, %c0_7] : memref<384x384xbf16, #tpu.memory_space<vmem>>, vector<384x384xbf16>
    %cst_8 = arith.constant dense<0.000000e+00> : vector<384x128xf32>
    %10 = tpu.matmul %9, %8, %cst_8 {dimension_numbers = #tpu.dot_dimension_numbers<[1], [0], [0], [1], [0, 0, 1, 1], [], []>} : vector<384x384xbf16>, vector<384x128xbf16>, vector<384x128xf32> -> vector<384x128xf32>
    %c0_9 = arith.constant 0 : index
    %c0_10 = arith.constant 0 : index
    %11 = vector.load %arg5[%c0_9, %c0_10] : memref<384x1xf32, #tpu.memory_space<vmem>>, vector<384x1xf32>
    %12 = vector.broadcast %11 : vector<384x1xf32> to vector<384x128xf32>
    %13 = arith.addf %10, %12 : vector<384x128xf32>
    %cst_11 = arith.constant 0.000000e+00 : f32
    %14 = vector.broadcast %cst_11 : f32 to vector<384x128xf32>
    %15 = arith.maximumf %13, %14 : vector<384x128xf32>
    %16 = arith.truncf %15 : vector<384x128xf32> to vector<384x128xbf16>
    %c0_12 = arith.constant 0 : index
    %c0_13 = arith.constant 0 : index
    %17 = vector.load %arg6[%c0_12, %c0_13] : memref<256x384xbf16, #tpu.memory_space<vmem>>, vector<256x384xbf16>
    %cst_14 = arith.constant dense<0.000000e+00> : vector<256x128xf32>
    %18 = tpu.matmul %17, %16, %cst_14 {dimension_numbers = #tpu.dot_dimension_numbers<[1], [0], [0], [1], [0, 0, 1, 1], [], []>} : vector<256x384xbf16>, vector<384x128xbf16>, vector<256x128xf32> -> vector<256x128xf32>
    %c0_15 = arith.constant 0 : index
    %c0_16 = arith.constant 0 : index
    %19 = vector.load %arg7[%c0_15, %c0_16] : memref<256x1xf32, #tpu.memory_space<vmem>>, vector<256x1xf32>
    %20 = vector.broadcast %19 : vector<256x1xf32> to vector<256x128xf32>
    %21 = arith.addf %18, %20 : vector<256x128xf32>
    %cst_17 = arith.constant 0.000000e+00 : f32
    %22 = vector.broadcast %cst_17 : f32 to vector<256x128xf32>
    %23 = arith.maximumf %21, %22 : vector<256x128xf32>
    %24 = arith.truncf %23 : vector<256x128xf32> to vector<256x128xbf16>
    %c0_18 = arith.constant 0 : index
    %c0_19 = arith.constant 0 : index
    %25 = vector.load %arg8[%c0_18, %c0_19] : memref<8x256xbf16, #tpu.memory_space<vmem>>, vector<8x256xbf16>
    %cst_20 = arith.constant dense<0.000000e+00> : vector<8x128xf32>
    %26 = tpu.matmul %25, %24, %cst_20 {dimension_numbers = #tpu.dot_dimension_numbers<[1], [0], [0], [1], [0, 0, 1, 1], [], []>} : vector<8x256xbf16>, vector<256x128xbf16>, vector<8x128xf32> -> vector<8x128xf32>
    %27 = vector.extract_strided_slice %26 {offsets = [0, 0], sizes = [1, 128], strides = [1, 1]} : vector<8x128xf32> to vector<1x128xf32>
    %c0_21 = arith.constant 0 : index
    %c0_22 = arith.constant 0 : index
    %28 = vector.load %arg9[%c0_21, %c0_22] : memref<1x1xf32, #tpu.memory_space<vmem>>, vector<1x1xf32>
    %29 = vector.broadcast %28 : vector<1x1xf32> to vector<1x128xf32>
    %30 = arith.addf %27, %29 : vector<1x128xf32>
    %31 = arith.negf %30 : vector<1x128xf32>
    %32 = math.exp %31 : vector<1x128xf32>
    %cst_23 = arith.constant 1.000000e+00 : f32
    %33 = vector.broadcast %cst_23 : f32 to vector<1x128xf32>
    %34 = arith.addf %33, %32 : vector<1x128xf32>
    %35 = arith.divf %33, %34 : vector<1x128xf32>
    %c0_24 = arith.constant 0 : index
    %c0_25 = arith.constant 0 : index
    %36 = vector.load %arg10[%c0_24, %c0_25] : memref<1x128xf32, #tpu.memory_space<vmem>>, vector<1x128xf32>
    tpu.vector_store %arg10[%c0_24, %c0_25], %35 {strides = array<i32>} : memref<1x128xf32, #tpu.memory_space<vmem>>, vector<1x128xf32>,
    return
  }
  func.func @transform_0(%arg0: i32) -> (i32, i32) {
    %c0_i32 = arith.constant 0 : i32
    %c0_i32_0 = arith.constant 0 : i32
    return %c0_i32, %arg0 : i32, i32
  }
  func.func @transform_1(%arg0: i32) -> (i32, i32) {
    %c0_i32 = arith.constant 0 : i32
    %c0_i32_0 = arith.constant 0 : i32
    %c0_i32_1 = arith.constant 0 : i32
    return %c0_i32, %c0_i32_0 : i32, i32
  }
  func.func @transform_2(%arg0: i32) -> (i32, i32) {
    %c0_i32 = arith.constant 0 : i32
    %c0_i32_0 = arith.constant 0 : i32
    %c0_i32_1 = arith.constant 0 : i32
    return %c0_i32, %c0_i32_0 : i32, i32
  }
  func.func @transform_3(%arg0: i32) -> (i32, i32) {
    %c0_i32 = arith.constant 0 : i32
    %c0_i32_0 = arith.constant 0 : i32
    %c0_i32_1 = arith.constant 0 : i32
    return %c0_i32, %c0_i32_0 : i32, i32
  }
  func.func @transform_4(%arg0: i32) -> (i32, i32) {
    %c0_i32 = arith.constant 0 : i32
    %c0_i32_0 = arith.constant 0 : i32
    %c0_i32_1 = arith.constant 0 : i32
    return %c0_i32, %c0_i32_0 : i32, i32
  }
  func.func @transform_5(%arg0: i32) -> (i32, i32) {
    %c0_i32 = arith.constant 0 : i32
    %c0_i32_0 = arith.constant 0 : i32
    %c0_i32_1 = arith.constant 0 : i32
    return %c0_i32, %c0_i32_0 : i32, i32
  }
  func.func @transform_6(%arg0: i32) -> (i32, i32) {
    %c0_i32 = arith.constant 0 : i32
    %c0_i32_0 = arith.constant 0 : i32
    %c0_i32_1 = arith.constant 0 : i32
    return %c0_i32, %c0_i32_0 : i32, i32
  }
  func.func @transform_7(%arg0: i32) -> (i32, i32) {
    %c0_i32 = arith.constant 0 : i32
    %c0_i32_0 = arith.constant 0 : i32
    %c0_i32_1 = arith.constant 0 : i32
    return %c0_i32, %c0_i32_0 : i32, i32
  }
  func.func @transform_8(%arg0: i32) -> (i32, i32) {
    %c0_i32 = arith.constant 0 : i32
    %c0_i32_0 = arith.constant 0 : i32
    %c0_i32_1 = arith.constant 0 : i32
    return %c0_i32, %c0_i32_0 : i32, i32
  }
  func.func @transform_9(%arg0: i32) -> (i32, i32) {
    %c0_i32 = arith.constant 0 : i32
    %c0_i32_0 = arith.constant 0 : i32
    return %c0_i32, %arg0 : i32, i32
  }
}

</mosaic_0001>

<llo_original>
// kernel: tpu_custom_call.1
$region0: #{tpu_custom_call.1}
  #allocation0 [shape = 'u32[]', space=smem, size = 0x4, offset = 0x4, fixed_abs, tag = 'smem constant byte address 0x4 - core index']
  #allocation1 [shape = 'u32[72,128]{1,0:T(1,128)}', space=vmem, size = 0x9000, scoped, tag = 'internal scratch']
  #allocation2 [shape = 'f32[1,1]{1,0:T(1,128)S(1)}', space=vmem, size = 0x200, scoped, tag = 'scoped memory for tpu_custom_call.1']
  %s0 = inlined_call_operand.vmem [shape: bf16[128,128], index: 0, kind: input, shape index: {}]
  %s1 = inlined_call_operand.hbm [shape: bf16[384,128], index: 1, kind: input, shape index: {}]
  %s2 = inlined_call_operand.vmem [shape: f32[384,1], index: 2, kind: input, shape index: {}]
  %s3 = inlined_call_operand.vmem [shape: bf16[384,384], index: 3, kind: input, shape index: {}]
  %s4 = inlined_call_operand.vmem [shape: f32[384,1], index: 4, kind: input, shape index: {}]
  %s5 = inlined_call_operand.vmem [shape: bf16[256,384], index: 5, kind: input, shape index: {}]
  %s6 = inlined_call_operand.vmem [shape: f32[256,1], index: 6, kind: input, shape index: {}]
  %s7 = inlined_call_operand.vmem [shape: bf16[8,256], index: 7, kind: input, shape index: {}]
  %s8 = inlined_call_operand.<no memory space> [shape: f32[1,1], index: 8, kind: input, shape index: {}]
  %s9 = inlined_call_operand.hbm [shape: f32[1,128], index: 9, kind: output, shape index: {}]
  %s10 = sld [smem:[#allocation0]]
  $region50: #{tpu_custom_call.1} parent=0
    _
  %s12 = ssub.s32 1, %s10
  %s13 = scalar_select 0, %s12, %s10
  %v14 = vstv %s8
  %15 = vst [vmem:[#allocation2] sm:$0x1] %v14
  $region1: #{tpu_custom_call.1} parent=0
    #allocation3 [shape = 'u8[98304]{0}', space=vmem, size = 0x18000, scoped, tag = 'input window, operand 1, single buffered']
    #allocation4 [shape = 's32[1]{0}', space=sflag, size = 0x4, scoped, tag = 'scoped memory for tpu_custom_call.1']
    #allocation5 [shape = 's32[1]{0}', space=sflag, size = 0x4, scoped, tag = 'scoped memory for tpu_custom_call.1']
    #allocation6 [shape = 'u8[512]{0}', space=vmem, size = 0x400, scoped, tag = 'output window, operand 0, single buffered']
    %16 = vsyncpa [#allocation4], 0
    %17 = vsyncpa [#allocation5], 0
    // Predicated region
    $region2: #{tpu_custom_call.1} parent=1 // pred_check
      _
    $region3: #{tpu_custom_call.1} parent=1 // pred_check_branch
      %19 = sbr.rel (0) target = $region5
    $region4: #{tpu_custom_call.1} parent=1 // pred_region
      _
    $region5: #{tpu_custom_call.1} parent=1 // pred_fallthru
      _
    // Predicated region
    $region6: #{tpu_custom_call.1} parent=1 // pred_check
      _
    $region7: #{tpu_custom_call.1} parent=1 // pred_check_branch
      %21 = sbr.rel (0) target = $region9
    $region8: #{tpu_custom_call.1} parent=1 // pred_region
      %23 = vsyncadd [#allocation4], 0
      %s24 = sshll.u32 %s1, 4
      %s25 = int_to_ptr.hbm [resolvable:$true] %s24
      %s26 = sshll.u32 [#allocation3], 4
      %s27 = int_to_ptr.vmem [resolvable:$true] %s26
      %32 = dma.hbm_to_vmem [thread:$0]  %s25, 3072, %s27, [#allocation4], 64, 64, 4
    $region9: #{tpu_custom_call.1} parent=1 // pred_fallthru
      _
    // Predicated region
    $region10: #{tpu_custom_call.1} parent=1 // pred_check
      _
    $region11: #{tpu_custom_call.1} parent=1 // pred_check_branch
      %34 = sbr.rel (0) target = $region13
    $region12: #{tpu_custom_call.1} parent=1 // pred_region
      _
    $region13: #{tpu_custom_call.1} parent=1 // pred_fallthru
      _
    // Predicated region
    $region14: #{tpu_custom_call.1} parent=1 // pred_check
      _
    $region15: #{tpu_custom_call.1} parent=1 // pred_check_branch
      %36 = sbr.rel (0) target = $region17
    $region16: #{tpu_custom_call.1} parent=1 // pred_region
      _
    $region17: #{tpu_custom_call.1} parent=1 // pred_fallthru
      _
    // Predicated region
    $region18: #{tpu_custom_call.1} parent=1 // pred_check
      _
    $region19: #{tpu_custom_call.1} parent=1 // pred_check_branch
      %38 = sbr.rel (0) target = $region21
    $region20: #{tpu_custom_call.1} parent=1 // pred_region
      _
    $region21: #{tpu_custom_call.1} parent=1 // pred_fallthru
      _
    // Predicated region
    $region22: #{tpu_custom_call.1} parent=1 // pred_check
      _
    $region23: #{tpu_custom_call.1} parent=1 // pred_check_branch
      %40 = sbr.rel (0) target = $region25
    $region24: #{tpu_custom_call.1} parent=1 // pred_region
      _
    $region25: #{tpu_custom_call.1} parent=1 // pred_fallthru
      _
    // Predicated region
    $region26: #{tpu_custom_call.1} parent=1 // pred_check
      _
    $region27: #{tpu_custom_call.1} parent=1 // pred_check_branch
      %42 = sbr.rel (0) target = $region29
    $region28: #{tpu_custom_call.1} parent=1 // pred_region
      _
    $region29: #{tpu_custom_call.1} parent=1 // pred_fallthru
      _
    // Predicated region
    $region30: #{tpu_custom_call.1} parent=1 // pred_check
      _
    $region31: #{tpu_custom_call.1} parent=1 // pred_check_branch
      %44 = sbr.rel (0) target = $region33
    $region32: #{tpu_custom_call.1} parent=1 // pred_region
      _
    $region33: #{tpu_custom_call.1} parent=1 // pred_fallthru
      _
    // Predicated region
    $region34: #{tpu_custom_call.1} parent=1 // pred_check
      _
    $region35: #{tpu_custom_call.1} parent=1 // pred_check_branch
      %46 = sbr.rel (0) target = $region37
    $region36: #{tpu_custom_call.1} parent=1 // pred_region
      _
    $region37: #{tpu_custom_call.1} parent=1 // pred_fallthru
      _
    // Predicated region
    $region38: #{tpu_custom_call.1} parent=1 // pred_check
      _
    $region39: #{tpu_custom_call.1} parent=1 // pred_check_branch
      %48 = sbr.rel (0) target = $region41
    $region40: #{tpu_custom_call.1} parent=1 // pred_region
      %50 = dma.done [#allocation4], 3072
    $region41: #{tpu_custom_call.1} parent=1 // pred_fallthru
      _
    %v51 = vld [vmem:[%s0] sm:$0xf]
    %v52 = vld [vmem:[%s0 + $0x4] sm:$0xf]
    %v53 = vld [vmem:[%s0 + $0x8] sm:$0xf]
    %v54 = vld [vmem:[%s0 + $0xc] sm:$0xf]
    %v55 = vld [vmem:[%s0 + $0x10] sm:$0xf]
    %v56 = vld [vmem:[%s0 + $0x14] sm:$0xf]
    %v57 = vld [vmem:[%s0 + $0x18] sm:$0xf]
    %v58 = vld [vmem:[%s0 + $0x1c] sm:$0xf]
    %v59 = vld [vmem:[%s0 + $0x20] sm:$0xf]
    %v60 = vld [vmem:[%s0 + $0x24] sm:$0xf]
    %v61 = vld [vmem:[%s0 + $0x28] sm:$0xf]
    %v62 = vld [vmem:[%s0 + $0x2c] sm:$0xf]
    %v63 = vld [vmem:[%s0 + $0x30] sm:$0xf]
    %v64 = vld [vmem:[%s0 + $0x34] sm:$0xf]
    %v65 = vld [vmem:[%s0 + $0x38] sm:$0xf]
    %v66 = vld [vmem:[%s0 + $0x3c] sm:$0xf]
    %v67 = vld [vmem:[#allocation3] sm:$0xf]
    %v68 = vld [vmem:[#allocation3 + $0x4] sm:$0xf]
    %v69 = vld [vmem:[#allocation3 + $0x8] sm:$0xf]
    %v70 = vld [vmem:[#allocation3 + $0xc] sm:$0xf]
    %v71 = vld [vmem:[#allocation3 + $0x10] sm:$0xf]
    %v72 = vld [vmem:[#allocation3 + $0x14] sm:$0xf]
    %v73 = vld [vmem:[#allocation3 + $0x18] sm:$0xf]
    %v74 = vld [vmem:[#allocation3 + $0x1c] sm:$0xf]
    %v75 = vld [vmem:[#allocation3 + $0x20] sm:$0xf]
    %v76 = vld [vmem:[#allocation3 + $0x24] sm:$0xf]
    %v77 = vld [vmem:[#allocation3 + $0x28] sm:$0xf]
    %v78 = vld [vmem:[#allocation3 + $0x2c] sm:$0xf]
    %v79 = vld [vmem:[#allocation3 + $0x30] sm:$0xf]
    %v80 = vld [vmem:[#allocation3 + $0x34] sm:$0xf]
    %v81 = vld [vmem:[#allocation3 + $0x38] sm:$0xf]
    %v82 = vld [vmem:[#allocation3 + $0x3c] sm:$0xf]
    %v83 = vld [vmem:[#allocation3 + $0x40] sm:$0xf]
    %v84 = vld [vmem:[#allocation3 + $0x44] sm:$0xf]
    %v85 = vld [vmem:[#allocation3 + $0x48] sm:$0xf]
    %v86 = vld [vmem:[#allocation3 + $0x4c] sm:$0xf]
    %v87 = vld [vmem:[#allocation3 + $0x50] sm:$0xf]
    %v88 = vld [vmem:[#allocation3 + $0x54] sm:$0xf]
    %v89 = vld [vmem:[#allocation3 + $0x58] sm:$0xf]
    %v90 = vld [vmem:[#allocation3 + $0x5c] sm:$0xf]
    %v91 = vld [vmem:[#allocation3 + $0x60] sm:$0xf]
    %v92 = vld [vmem:[#allocation3 + $0x64] sm:$0xf]
    %v93 = vld [vmem:[#allocation3 + $0x68] sm:$0xf]
    %v94 = vld [vmem:[#allocation3 + $0x6c] sm:$0xf]
    %v95 = vld [vmem:[#allocation3 + $0x70] sm:$0xf]
    %v96 = vld [vmem:[#allocation3 + $0x74] sm:$0xf]
    %v97 = vld [vmem:[#allocation3 + $0x78] sm:$0xf]
    %v98 = vld [vmem:[#allocation3 + $0x7c] sm:$0xf]
    %v99 = vld [vmem:[#allocation3 + $0x80] sm:$0xf]
    %v100 = vld [vmem:[#allocation3 + $0x84] sm:$0xf]
    %v101 = vld [vmem:[#allocation3 + $0x88] sm:$0xf]
    %v102 = vld [vmem:[#allocation3 + $0x8c] sm:$0xf]
    %v103 = vld [vmem:[#allocation3 + $0x90] sm:$0xf]
    %v104 = vld [vmem:[#allocation3 + $0x94] sm:$0xf]
    %v105 = vld [vmem:[#allocation3 + $0x98] sm:$0xf]
    %v106 = vld [vmem:[#allocation3 + $0x9c] sm:$0xf]
    %v107 = vld [vmem:[#allocation3 + $0xa0] sm:$0xf]
    %v108 = vld [vmem:[#allocation3 + $0xa4] sm:$0xf]
    %v109 = vld [vmem:[#allocation3 + $0xa8] sm:$0xf]
    %v110 = vld [vmem:[#allocation3 + $0xac] sm:$0xf]
    %v111 = vld [vmem:[#allocation3 + $0xb0] sm:$0xf]
    %v112 = vld [vmem:[#allocation3 + $0xb4] sm:$0xf]
    %v113 = vld [vmem:[#allocation3 + $0xb8] sm:$0xf]
    %v114 = vld [vmem:[#allocation3 + $0xbc] sm:$0xf]
    %v115 = vld [vmem:[%s2] sm:$0xff]
    %v116 = vld [vmem:[%s2 + $0x8] sm:$0xff]
    %v117 = vld [vmem:[%s2 + $0x10] sm:$0xff]
    %v118 = vld [vmem:[%s2 + $0x18] sm:$0xff]
    %v119 = vld [vmem:[%s2 + $0x20] sm:$0xff]
    %v120 = vld [vmem:[%s2 + $0x28] sm:$0xff]
    %v121 = vld [vmem:[%s2 + $0x30] sm:$0xff]
    %v122 = vld [vmem:[%s2 + $0x38] sm:$0xff]
    %v123 = vld [vmem:[%s2 + $0x40] sm:$0xff]
    %v124 = vld [vmem:[%s2 + $0x48] sm:$0xff]
    %v125 = vld [vmem:[%s2 + $0x50] sm:$0xff]
    %v126 = vld [vmem:[%s2 + $0x58] sm:$0xff]
    %v127 = vld [vmem:[%s2 + $0x60] sm:$0xff]
    %v128 = vld [vmem:[%s2 + $0x68] sm:$0xff]
    %v129 = vld [vmem:[%s2 + $0x70] sm:$0xff]
    %v130 = vld [vmem:[%s2 + $0x78] sm:$0xff]
    %v131 = vld [vmem:[%s2 + $0x80] sm:$0xff]
    %v132 = vld [vmem:[%s2 + $0x88] sm:$0xff]
    %v133 = vld [vmem:[%s2 + $0x90] sm:$0xff]
    %v134 = vld [vmem:[%s2 + $0x98] sm:$0xff]
    %v135 = vld [vmem:[%s2 + $0xa0] sm:$0xff]
    %v136 = vld [vmem:[%s2 + $0xa8] sm:$0xff]
    %v137 = vld [vmem:[%s2 + $0xb0] sm:$0xff]
    %v138 = vld [vmem:[%s2 + $0xb8] sm:$0xff]
    %v139 = vld [vmem:[%s2 + $0xc0] sm:$0xff]
    %v140 = vld [vmem:[%s2 + $0xc8] sm:$0xff]
    %v141 = vld [vmem:[%s2 + $0xd0] sm:$0xff]
    %v142 = vld [vmem:[%s2 + $0xd8] sm:$0xff]
    %v143 = vld [vmem:[%s2 + $0xe0] sm:$0xff]
    %v144 = vld [vmem:[%s2 + $0xe8] sm:$0xff]
    %v145 = vld [vmem:[%s2 + $0xf0] sm:$0xff]
    %v146 = vld [vmem:[%s2 + $0xf8] sm:$0xff]
    %v147 = vld [vmem:[%s2 + $0x100] sm:$0xff]
    %v148 = vld [vmem:[%s2 + $0x108] sm:$0xff]
    %v149 = vld [vmem:[%s2 + $0x110] sm:$0xff]
    %v150 = vld [vmem:[%s2 + $0x118] sm:$0xff]
    %v151 = vld [vmem:[%s2 + $0x120] sm:$0xff]
    %v152 = vld [vmem:[%s2 + $0x128] sm:$0xff]
    %v153 = vld [vmem:[%s2 + $0x130] sm:$0xff]
    %v154 = vld [vmem:[%s2 + $0x138] sm:$0xff]
    %v155 = vld [vmem:[%s2 + $0x140] sm:$0xff]
    %v156 = vld [vmem:[%s2 + $0x148] sm:$0xff]
    %v157 = vld [vmem:[%s2 + $0x150] sm:$0xff]
    %v158 = vld [vmem:[%s2 + $0x158] sm:$0xff]
    %v159 = vld [vmem:[%s2 + $0x160] sm:$0xff]
    %v160 = vld [vmem:[%s2 + $0x168] sm:$0xff]
    %v161 = vld [vmem:[%s2 + $0x170] sm:$0xff]
    %v162 = vld [vmem:[%s2 + $0x178] sm:$0xff]
    %164 = vset.pattern.permute.xlu0 0
    %165 = vperm.xlu0 %164, %v115
    %v166 = vpop.permute.xlu0 %165
    %169 = vset.pattern.permute.xlu0 0
    %170 = vperm.xlu0 %169, %v116
    %v171 = vpop.permute.xlu0 %170
    %174 = vset.pattern.permute.xlu0 0
    %175 = vperm.xlu0 %174, %v117
    %v176 = vpop.permute.xlu0 %175
    %179 = vset.pattern.permute.xlu0 0
    %180 = vperm.xlu0 %179, %v118
    %v181 = vpop.permute.xlu0 %180
    %184 = vset.pattern.permute.xlu0 0
    %185 = vperm.xlu0 %184, %v119
    %v186 = vpop.permute.xlu0 %185
    %189 = vset.pattern.permute.xlu0 0
    %190 = vperm.xlu0 %189, %v120
    %v191 = vpop.permute.xlu0 %190
    %194 = vset.pattern.permute.xlu0 0
    %195 = vperm.xlu0 %194, %v121
    %v196 = vpop.permute.xlu0 %195
    %199 = vset.pattern.permute.xlu0 0
    %200 = vperm.xlu0 %199, %v122
    %v201 = vpop.permute.xlu0 %200
    %204 = vset.pattern.permute.xlu0 0
    %205 = vperm.xlu0 %204, %v123
    %v206 = vpop.permute.xlu0 %205
    %209 = vset.pattern.permute.xlu0 0
    %210 = vperm.xlu0 %209, %v124
    %v211 = vpop.permute.xlu0 %210
    %214 = vset.pattern.permute.xlu0 0
    %215 = vperm.xlu0 %214, %v125
    %v216 = vpop.permute.xlu0 %215
    %219 = vset.pattern.permute.xlu0 0
    %220 = vperm.xlu0 %219, %v126
    %v221 = vpop.permute.xlu0 %220
    %224 = vset.pattern.permute.xlu0 0
    %225 = vperm.xlu0 %224, %v127
    %v226 = vpop.permute.xlu0 %225
    %229 = vset.pattern.permute.xlu0 0
    %230 = vperm.xlu0 %229, %v128
    %v231 = vpop.permute.xlu0 %230
    %234 = vset.pattern.permute.xlu0 0
    %235 = vperm.xlu0 %234, %v129
    %v236 = vpop.permute.xlu0 %235
    %239 = vset.pattern.permute.xlu0 0
    %240 = vperm.xlu0 %239, %v130
    %v241 = vpop.permute.xlu0 %240
    %244 = vset.pattern.permute.xlu0 0
    %245 = vperm.xlu0 %244, %v131
    %v246 = vpop.permute.xlu0 %245
    %249 = vset.pattern.permute.xlu0 0
    %250 = vperm.xlu0 %249, %v132
    %v251 = vpop.permute.xlu0 %250
    %254 = vset.pattern.permute.xlu0 0
    %255 = vperm.xlu0 %254, %v133
    %v256 = vpop.permute.xlu0 %255
    %259 = vset.pattern.permute.xlu0 0
    %260 = vperm.xlu0 %259, %v134
    %v261 = vpop.permute.xlu0 %260
    %264 = vset.pattern.permute.xlu0 0
    %265 = vperm.xlu0 %264, %v135
    %v266 = vpop.permute.xlu0 %265
    %269 = vset.pattern.permute.xlu0 0
    %270 = vperm.xlu0 %269, %v136
    %v271 = vpop.permute.xlu0 %270
    %274 = vset.pattern.permute.xlu0 0
    %275 = vperm.xlu0 %274, %v137
    %v276 = vpop.permute.xlu0 %275
    %279 = vset.pattern.permute.xlu0 0
    %280 = vperm.xlu0 %279, %v138
    %v281 = vpop.permute.xlu0 %280
    %284 = vset.pattern.permute.xlu0 0
    %285 = vperm.xlu0 %284, %v139
    %v286 = vpop.permute.xlu0 %285
    %289 = vset.pattern.permute.xlu0 0
    %290 = vperm.xlu0 %289, %v140
    %v291 = vpop.permute.xlu0 %290
    %294 = vset.pattern.permute.xlu0 0
    %295 = vperm.xlu0 %294, %v141
    %v296 = vpop.permute.xlu0 %295
    %299 = vset.pattern.permute.xlu0 0
    %300 = vperm.xlu0 %299, %v142
    %v301 = vpop.permute.xlu0 %300
    %304 = vset.pattern.permute.xlu0 0
    %305 = vperm.xlu0 %304, %v143
    %v306 = vpop.permute.xlu0 %305
    %309 = vset.pattern.permute.xlu0 0
    %310 = vperm.xlu0 %309, %v144
    %v311 = vpop.permute.xlu0 %310
    %314 = vset.pattern.permute.xlu0 0
    %315 = vperm.xlu0 %314, %v145
    %v316 = vpop.permute.xlu0 %315
    %319 = vset.pattern.permute.xlu0 0
    %320 = vperm.xlu0 %319, %v146
    %v321 = vpop.permute.xlu0 %320
    %324 = vset.pattern.permute.xlu0 0
    %325 = vperm.xlu0 %324, %v147
    %v326 = vpop.permute.xlu0 %325
    %329 = vset.pattern.permute.xlu0 0
    %330 = vperm.xlu0 %329, %v148
    %v331 = vpop.permute.xlu0 %330
    %334 = vset.pattern.permute.xlu0 0
    %335 = vperm.xlu0 %334, %v149
    %v336 = vpop.permute.xlu0 %335
    %339 = vset.pattern.permute.xlu0 0
    %340 = vperm.xlu0 %339, %v150
    %v341 = vpop.permute.xlu0 %340
    %344 = vset.pattern.permute.xlu0 0
    %345 = vperm.xlu0 %344, %v151
    %v346 = vpop.permute.xlu0 %345
    %349 = vset.pattern.permute.xlu0 0
    %350 = vperm.xlu0 %349, %v152
    %v351 = vpop.permute.xlu0 %350
    %354 = vset.pattern.permute.xlu0 0
    %355 = vperm.xlu0 %354, %v153
    %v356 = vpop.permute.xlu0 %355
    %359 = vset.pattern.permute.xlu0 0
    %360 = vperm.xlu0 %359, %v154
    %v361 = vpop.permute.xlu0 %360
    %364 = vset.pattern.permute.xlu0 0
    %365 = vperm.xlu0 %364, %v155
    %v366 = vpop.permute.xlu0 %365
    %369 = vset.pattern.permute.xlu0 0
    %370 = vperm.xlu0 %369, %v156
    %v371 = vpop.permute.xlu0 %370
    %374 = vset.pattern.permute.xlu0 0
    %375 = vperm.xlu0 %374, %v157
    %v376 = vpop.permute.xlu0 %375
    %379 = vset.pattern.permute.xlu0 0
    %380 = vperm.xlu0 %379, %v158
    %v381 = vpop.permute.xlu0 %380
    %384 = vset.pattern.permute.xlu0 0
    %385 = vperm.xlu0 %384, %v159
    %v386 = vpop.permute.xlu0 %385
    %389 = vset.pattern.permute.xlu0 0
    %390 = vperm.xlu0 %389, %v160
    %v391 = vpop.permute.xlu0 %390
    %394 = vset.pattern.permute.xlu0 0
    %395 = vperm.xlu0 %394, %v161
    %v396 = vpop.permute.xlu0 %395
    %399 = vset.pattern.permute.xlu0 0
    %400 = vperm.xlu0 %399, %v162
    %v401 = vpop.permute.xlu0 %400
    %v451 = vunpack.c.l.b16 %v67
    %v452 = vunpack.c.l.b16 %v68
    %v453 = vunpack.c.l.b16 %v69
    %v454 = vunpack.c.l.b16 %v70
    %v455 = vunpack.c.l.b16 %v71
    %v456 = vunpack.c.l.b16 %v72
    %v457 = vunpack.c.l.b16 %v73
    %v458 = vunpack.c.l.b16 %v74
    %v459 = vunpack.c.l.b16 %v75
    %v460 = vunpack.c.l.b16 %v76
    %v461 = vunpack.c.l.b16 %v77
    %v462 = vunpack.c.l.b16 %v78
    %v463 = vunpack.c.l.b16 %v79
    %v464 = vunpack.c.l.b16 %v80
    %v465 = vunpack.c.l.b16 %v81
    %v466 = vunpack.c.l.b16 %v82
    %v467 = vunpack.c.l.b16 %v83
    %v468 = vunpack.c.l.b16 %v84
    %v469 = vunpack.c.l.b16 %v85
    %v470 = vunpack.c.l.b16 %v86
    %v471 = vunpack.c.l.b16 %v87
    %v472 = vunpack.c.l.b16 %v88
    %v473 = vunpack.c.l.b16 %v89
    %v474 = vunpack.c.l.b16 %v90
    %v475 = vunpack.c.l.b16 %v91
    %v476 = vunpack.c.l.b16 %v92
    %v477 = vunpack.c.l.b16 %v93
    %v478 = vunpack.c.l.b16 %v94
    %v479 = vunpack.c.l.b16 %v95
    %v480 = vunpack.c.l.b16 %v96
    %v481 = vunpack.c.l.b16 %v97
    %v482 = vunpack.c.l.b16 %v98
    %v483 = vunpack.c.l.b16 %v99
    %v484 = vunpack.c.l.b16 %v100
    %v485 = vunpack.c.l.b16 %v101
    %v486 = vunpack.c.l.b16 %v102
    %v487 = vunpack.c.l.b16 %v103
    %v488 = vunpack.c.l.b16 %v104
    %v489 = vunpack.c.l.b16 %v105
    %v490 = vunpack.c.l.b16 %v106
    %v491 = vunpack.c.l.b16 %v107
    %v492 = vunpack.c.l.b16 %v108
    %v493 = vunpack.c.l.b16 %v109
    %v494 = vunpack.c.l.b16 %v110
    %v495 = vunpack.c.l.b16 %v111
    %v496 = vunpack.c.l.b16 %v112
    %v497 = vunpack.c.l.b16 %v113
    %v498 = vunpack.c.l.b16 %v114
    %v499 = vpack.c.b16 %v452, %v451
    %v500 = vpack.c.b16 %v454, %v453
    %v501 = vpack.c.b16 %v456, %v455
    %v502 = vpack.c.b16 %v458, %v457
    %v503 = vpack.c.b16 %v460, %v459
    %v504 = vpack.c.b16 %v462, %v461
    %v505 = vpack.c.b16 %v464, %v463
    %v506 = vpack.c.b16 %v466, %v465
    %v507 = vpack.c.b16 %v468, %v467
    %v508 = vpack.c.b16 %v470, %v469
    %v509 = vpack.c.b16 %v472, %v471
    %v510 = vpack.c.b16 %v474, %v473
    %v511 = vpack.c.b16 %v476, %v475
    %v512 = vpack.c.b16 %v478, %v477
    %v513 = vpack.c.b16 %v480, %v479
    %v514 = vpack.c.b16 %v482, %v481
    %v515 = vpack.c.b16 %v484, %v483
    %v516 = vpack.c.b16 %v486, %v485
    %v517 = vpack.c.b16 %v488, %v487
    %v518 = vpack.c.b16 %v490, %v489
    %v519 = vpack.c.b16 %v492, %v491
    %v520 = vpack.c.b16 %v494, %v493
    %v521 = vpack.c.b16 %v496, %v495
    %v522 = vpack.c.b16 %v498, %v497
    %v563 = vunpack.c.l.b16 %v51
    %v564 = vunpack.c.l.b16 %v52
    %v565 = vunpack.c.l.b16 %v53
    %v566 = vunpack.c.l.b16 %v54
    %v567 = vunpack.c.l.b16 %v55
    %v568 = vunpack.c.l.b16 %v56
    %v569 = vunpack.c.l.b16 %v57
    %v570 = vunpack.c.l.b16 %v58
    %v571 = vunpack.c.l.b16 %v59
    %v572 = vunpack.c.l.b16 %v60
    %v573 = vunpack.c.l.b16 %v61
    %v574 = vunpack.c.l.b16 %v62
    %v575 = vunpack.c.l.b16 %v63
    %v576 = vunpack.c.l.b16 %v64
    %v577 = vunpack.c.l.b16 %v65
    %v578 = vunpack.c.l.b16 %v66
    %v579 = vpack.c.b16 %v564, %v563
    %v580 = vpack.c.b16 %v566, %v565
    %v581 = vpack.c.b16 %v568, %v567
    %v582 = vpack.c.b16 %v570, %v569
    %v583 = vpack.c.b16 %v572, %v571
    %v584 = vpack.c.b16 %v574, %v573
    %v585 = vpack.c.b16 %v576, %v575
    %v586 = vpack.c.b16 %v578, %v577
    %595 = vmatpush.bf16.msra.mxu0 %v586
    %596 = vmatpush.bf16.msra.mxu0 %v585
    %597 = vmatpush.bf16.msra.mxu0 %v584
    %598 = vmatpush.bf16.msra.mxu0 %v583
    %599 = vmatpush.bf16.msra.mxu0 %v582
    %600 = vmatpush.bf16.msra.mxu0 %v581
    %601 = vmatpush.bf16.msra.mxu0 %v580
    %602 = vmatpush.bf16.msra.mxu0 %v579
    %603 = vmatmul.bf16.gmra.mxu0 %v499
    %v604 = vpop.f32.mrf.mxu0
    %v605 = vadd.f32 %v166, %v604
    %v606 = vpop.f32.mrf.mxu0
    %v607 = vadd.f32 %v171, %v606
    %608 = vmatmul.bf16.gmra.mxu0 %v500
    %v609 = vpop.f32.mrf.mxu0
    %v610 = vadd.f32 %v176, %v609
    %v611 = vpop.f32.mrf.mxu0
    %v612 = vadd.f32 %v181, %v611
    %613 = vmatmul.bf16.gmra.mxu0 %v501
    %v614 = vpop.f32.mrf.mxu0
    %v615 = vadd.f32 %v186, %v614
    %v616 = vpop.f32.mrf.mxu0
    %v617 = vadd.f32 %v191, %v616
    %618 = vmatmul.bf16.gmra.mxu0 %v502
    %v619 = vpop.f32.mrf.mxu0
    %v620 = vadd.f32 %v196, %v619
    %v621 = vpop.f32.mrf.mxu0
    %v622 = vadd.f32 %v201, %v621
    %623 = vmatmul.bf16.gmra.mxu0 %v503
    %v624 = vpop.f32.mrf.mxu0
    %v625 = vadd.f32 %v206, %v624
    %v626 = vpop.f32.mrf.mxu0
    %v627 = vadd.f32 %v211, %v626
    %628 = vmatmul.bf16.gmra.mxu0 %v504
    %v629 = vpop.f32.mrf.mxu0
    %v630 = vadd.f32 %v216, %v629
    %v631 = vpop.f32.mrf.mxu0
    %v632 = vadd.f32 %v221, %v631
    %633 = vmatmul.bf16.gmra.mxu0 %v505
    %v634 = vpop.f32.mrf.mxu0
    %v635 = vadd.f32 %v226, %v634
    %v636 = vpop.f32.mrf.mxu0
    %v637 = vadd.f32 %v231, %v636
    %638 = vmatmul.bf16.gmra.mxu0 %v506
    %v639 = vpop.f32.mrf.mxu0
    %v640 = vadd.f32 %v236, %v639
    %v641 = vpop.f32.mrf.mxu0
    %v642 = vadd.f32 %v241, %v641
    %643 = vmatmul.bf16.gmra.mxu0 %v507
    %v644 = vpop.f32.mrf.mxu0
    %v645 = vadd.f32 %v246, %v644
    %v646 = vpop.f32.mrf.mxu0
    %v647 = vadd.f32 %v251, %v646
    %648 = vmatmul.bf16.gmra.mxu0 %v508
    %v649 = vpop.f32.mrf.mxu0
    %v650 = vadd.f32 %v256, %v649
    %v651 = vpop.f32.mrf.mxu0
    %v652 = vadd.f32 %v261, %v651
    %653 = vmatmul.bf16.gmra.mxu0 %v509
    %v654 = vpop.f32.mrf.mxu0
    %v655 = vadd.f32 %v266, %v654
    %v656 = vpop.f32.mrf.mxu0
    %v657 = vadd.f32 %v271, %v656
    %658 = vmatmul.bf16.gmra.mxu0 %v510
    %v659 = vpop.f32.mrf.mxu0
    %v660 = vadd.f32 %v276, %v659
    %v661 = vpop.f32.mrf.mxu0
    %v662 = vadd.f32 %v281, %v661
    %663 = vmatmul.bf16.gmra.mxu0 %v511
    %v664 = vpop.f32.mrf.mxu0
    %v665 = vadd.f32 %v286, %v664
    %v666 = vpop.f32.mrf.mxu0
    %v667 = vadd.f32 %v291, %v666
    %668 = vmatmul.bf16.gmra.mxu0 %v512
    %v669 = vpop.f32.mrf.mxu0
    %v670 = vadd.f32 %v296, %v669
    %v671 = vpop.f32.mrf.mxu0
    %v672 = vadd.f32 %v301, %v671
    %673 = vmatmul.bf16.gmra.mxu0 %v513
    %v674 = vpop.f32.mrf.mxu0
    %v675 = vadd.f32 %v306, %v674
    %v676 = vpop.f32.mrf.mxu0
    %v677 = vadd.f32 %v311, %v676
    %678 = vmatmul.bf16.gmra.mxu0 %v514
    %v679 = vpop.f32.mrf.mxu0
    %v680 = vadd.f32 %v316, %v679
    %v681 = vpop.f32.mrf.mxu0
    %v682 = vadd.f32 %v321, %v681
    %683 = vmatmul.bf16.gmra.mxu0 %v515
    %v684 = vpop.f32.mrf.mxu0
    %v685 = vadd.f32 %v326, %v684
    %v686 = vpop.f32.mrf.mxu0
    %v687 = vadd.f32 %v331, %v686
    %688 = vmatmul.bf16.gmra.mxu0 %v516
    %v689 = vpop.f32.mrf.mxu0
    %v690 = vadd.f32 %v336, %v689
    %v691 = vpop.f32.mrf.mxu0
    %v692 = vadd.f32 %v341, %v691
    %693 = vmatmul.bf16.gmra.mxu0 %v517
    %v694 = vpop.f32.mrf.mxu0
    %v695 = vadd.f32 %v346, %v694
    %v696 = vpop.f32.mrf.mxu0
    %v697 = vadd.f32 %v351, %v696
    %698 = vmatmul.bf16.gmra.mxu0 %v518
    %v699 = vpop.f32.mrf.mxu0
    %v700 = vadd.f32 %v356, %v699
    %v701 = vpop.f32.mrf.mxu0
    %v702 = vadd.f32 %v361, %v701
    %703 = vmatmul.bf16.gmra.mxu0 %v519
    %v704 = vpop.f32.mrf.mxu0
    %v705 = vadd.f32 %v366, %v704
    %v706 = vpop.f32.mrf.mxu0
    %v707 = vadd.f32 %v371, %v706
    %708 = vmatmul.bf16.gmra.mxu0 %v520
    %v709 = vpop.f32.mrf.mxu0
    %v710 = vadd.f32 %v376, %v709
    %v711 = vpop.f32.mrf.mxu0
    %v712 = vadd.f32 %v381, %v711
    %713 = vmatmul.bf16.gmra.mxu0 %v521
    %v714 = vpop.f32.mrf.mxu0
    %v715 = vadd.f32 %v386, %v714
    %v716 = vpop.f32.mrf.mxu0
    %v717 = vadd.f32 %v391, %v716
    %718 = vmatmul.bf16.gmra.mxu0 %v522
    %v719 = vpop.f32.mrf.mxu0
    %v720 = vadd.f32 %v396, %v719
    %v721 = vpop.f32.mrf.mxu0
    %v722 = vadd.f32 %v401, %v721
    %723 = vdwg.mxu0
    %v724 = vmax.f32 %v605, 0.0
    %v725 = vmax.f32 %v607, 0.0
    %v726 = vmax.f32 %v610, 0.0
    %v727 = vmax.f32 %v612, 0.0
    %v728 = vmax.f32 %v615, 0.0
    %v729 = vmax.f32 %v617, 0.0
    %v730 = vmax.f32 %v620, 0.0
    %v731 = vmax.f32 %v622, 0.0
    %v732 = vmax.f32 %v625, 0.0
    %v733 = vmax.f32 %v627, 0.0
    %v734 = vmax.f32 %v630, 0.0
    %v735 = vmax.f32 %v632, 0.0
    %v736 = vmax.f32 %v635, 0.0
    %v737 = vmax.f32 %v637, 0.0
    %v738 = vmax.f32 %v640, 0.0
    %v739 = vmax.f32 %v642, 0.0
    %v740 = vmax.f32 %v645, 0.0
    %v741 = vmax.f32 %v647, 0.0
    %v742 = vmax.f32 %v650, 0.0
    %v743 = vmax.f32 %v652, 0.0
    %v744 = vmax.f32 %v655, 0.0
    %v745 = vmax.f32 %v657, 0.0
    %v746 = vmax.f32 %v660, 0.0
    %v747 = vmax.f32 %v662, 0.0
    %v748 = vmax.f32 %v665, 0.0
    %v749 = vmax.f32 %v667, 0.0
    %v750 = vmax.f32 %v670, 0.0
    %v751 = vmax.f32 %v672, 0.0
    %v752 = vmax.f32 %v675, 0.0
    %v753 = vmax.f32 %v677, 0.0
    %v754 = vmax.f32 %v680, 0.0
    %v755 = vmax.f32 %v682, 0.0
    %v756 = vmax.f32 %v685, 0.0
    %v757 = vmax.f32 %v687, 0.0
    %v758 = vmax.f32 %v690, 0.0
    %v759 = vmax.f32 %v692, 0.0
    %v760 = vmax.f32 %v695, 0.0
    %v761 = vmax.f32 %v697, 0.0
    %v762 = vmax.f32 %v700, 0.0
    %v763 = vmax.f32 %v702, 0.0
    %v764 = vmax.f32 %v705, 0.0
    %v765 = vmax.f32 %v707, 0.0
    %v766 = vmax.f32 %v710, 0.0
    %v767 = vmax.f32 %v712, 0.0
    %v768 = vmax.f32 %v715, 0.0
    %v769 = vmax.f32 %v717, 0.0
    %v770 = vmax.f32 %v720, 0.0
    %v771 = vmax.f32 %v722, 0.0
    %v772 = vpack.c.bf16 %v725, %v724
    %v773 = vpack.c.bf16 %v727, %v726
    %v774 = vpack.c.bf16 %v729, %v728
    %v775 = vpack.c.bf16 %v731, %v730
    %v776 = vpack.c.bf16 %v733, %v732
    %v777 = vpack.c.bf16 %v735, %v734
    %v778 = vpack.c.bf16 %v737, %v736
    %v779 = vpack.c.bf16 %v739, %v738
    %v780 = vpack.c.bf16 %v741, %v740
    %v781 = vpack.c.bf16 %v743, %v742
    %v782 = vpack.c.bf16 %v745, %v744
    %v783 = vpack.c.bf16 %v747, %v746
    %v784 = vpack.c.bf16 %v749, %v748
    %v785 = vpack.c.bf16 %v751, %v750
    %v786 = vpack.c.bf16 %v753, %v752
    %v787 = vpack.c.bf16 %v755, %v754
    %v788 = vpack.c.bf16 %v757, %v756
    %v789 = vpack.c.bf16 %v759, %v758
    %v790 = vpack.c.bf16 %v761, %v760
    %v791 = vpack.c.bf16 %v763, %v762
    %v792 = vpack.c.bf16 %v765, %v764
    %v793 = vpack.c.bf16 %v767, %v766
    %v794 = vpack.c.bf16 %v769, %v768
    %v795 = vpack.c.bf16 %v771, %v770
    %v796 = vld [vmem:[%s3] sm:$0xff]
    %v797 = vld [vmem:[%s3 + $0x8] sm:$0xf]
    %v798 = vld [vmem:[%s3 + $0xc] sm:$0xff]
    %v799 = vld [vmem:[%s3 + $0x14] sm:$0xf]
    %v800 = vld [vmem:[%s3 + $0x18] sm:$0xff]
    %v801 = vld [vmem:[%s3 + $0x20] sm:$0xf]
    %v802 = vld [vmem:[%s3 + $0x24] sm:$0xff]
    %v803 = vld [vmem:[%s3 + $0x2c] sm:$0xf]
    %v804 = vld [vmem:[%s3 + $0x30] sm:$0xff]
    %v805 = vld [vmem:[%s3 + $0x38] sm:$0xf]
    %v806 = vld [vmem:[%s3 + $0x3c] sm:$0xff]
    %v807 = vld [vmem:[%s3 + $0x44] sm:$0xf]
    %v808 = vld [vmem:[%s3 + $0x48] sm:$0xff]
    %v809 = vld [vmem:[%s3 + $0x50] sm:$0xf]
    %v810 = vld [vmem:[%s3 + $0x54] sm:$0xff]
    %v811 = vld [vmem:[%s3 + $0x5c] sm:$0xf]
    %v812 = vld [vmem:[%s3 + $0x60] sm:$0xff]
    %v813 = vld [vmem:[%s3 + $0x68] sm:$0xf]
    %v814 = vld [vmem:[%s3 + $0x6c] sm:$0xff]
    %v815 = vld [vmem:[%s3 + $0x74] sm:$0xf]
    %v816 = vld [vmem:[%s3 + $0x78] sm:$0xff]
    %v817 = vld [vmem:[%s3 + $0x80] sm:$0xf]
    %v818 = vld [vmem:[%s3 + $0x84] sm:$0xff]
    %v819 = vld [vmem:[%s3 + $0x8c] sm:$0xf]
    %v820 = vld [vmem:[%s3 + $0x90] sm:$0xff]
    %v821 = vld [vmem:[%s3 + $0x98] sm:$0xf]
    %v822 = vld [vmem:[%s3 + $0x9c] sm:$0xff]
    %v823 = vld [vmem:[%s3 + $0xa4] sm:$0xf]
    %v824 = vld [vmem:[%s3 + $0xa8] sm:$0xff]
    %v825 = vld [vmem:[%s3 + $0xb0] sm:$0xf]
    %v826 = vld [vmem:[%s3 + $0xb4] sm:$0xff]
    %v827 = vld [vmem:[%s3 + $0xbc] sm:$0xf]
    %v828 = vld [vmem:[%s3 + $0xc0] sm:$0xff]
    %v829 = vld [vmem:[%s3 + $0xc8] sm:$0xf]
    %v830 = vld [vmem:[%s3 + $0xcc] sm:$0xff]
    %v831 = vld [vmem:[%s3 + $0xd4] sm:$0xf]
    %v832 = vld [vmem:[%s3 + $0xd8] sm:$0xff]
    %v833 = vld [vmem:[%s3 + $0xe0] sm:$0xf]
    %v834 = vld [vmem:[%s3 + $0xe4] sm:$0xff]
    %v835 = vld [vmem:[%s3 + $0xec] sm:$0xf]
    %v836 = vld [vmem:[%s3 + $0xf0] sm:$0xff]
    %v837 = vld [vmem:[%s3 + $0xf8] sm:$0xf]
    %v838 = vld [vmem:[%s3 + $0xfc] sm:$0xff]
    %v839 = vld [vmem:[%s3 + $0x104] sm:$0xf]
    %v840 = vld [vmem:[%s3 + $0x108] sm:$0xff]
    %v841 = vld [vmem:[%s3 + $0x110] sm:$0xf]
    %v842 = vld [vmem:[%s3 + $0x114] sm:$0xff]
    %v843 = vld [vmem:[%s3 + $0x11c] sm:$0xf]
    %v844 = vld [vmem:[%s3 + $0x120] sm:$0xff]
    %v845 = vld [vmem:[%s3 + $0x128] sm:$0xf]
    %v846 = vld [vmem:[%s3 + $0x12c] sm:$0xff]
    %v847 = vld [vmem:[%s3 + $0x134] sm:$0xf]
    %v848 = vld [vmem:[%s3 + $0x138] sm:$0xff]
    %v849 = vld [vmem:[%s3 + $0x140] sm:$0xf]
    %v850 = vld [vmem:[%s3 + $0x144] sm:$0xff]
    %v851 = vld [vmem:[%s3 + $0x14c] sm:$0xf]
    %v852 = vld [vmem:[%s3 + $0x150] sm:$0xff]
    %v853 = vld [vmem:[%s3 + $0x158] sm:$0xf]
    %v854 = vld [vmem:[%s3 + $0x15c] sm:$0xff]
    %v855 = vld [vmem:[%s3 + $0x164] sm:$0xf]
    %v856 = vld [vmem:[%s3 + $0x168] sm:$0xff]
    %v857 = vld [vmem:[%s3 + $0x170] sm:$0xf]
    %v858 = vld [vmem:[%s3 + $0x174] sm:$0xff]
    %v859 = vld [vmem:[%s3 + $0x17c] sm:$0xf]
    %v860 = vld [vmem:[%s3 + $0x180] sm:$0xff]
    %v861 = vld [vmem:[%s3 + $0x188] sm:$0xf]
    %v862 = vld [vmem:[%s3 + $0x18c] sm:$0xff]
    %v863 = vld [vmem:[%s3 + $0x194] sm:$0xf]
    %v864 = vld [vmem:[%s3 + $0x198] sm:$0xff]
    %v865 = vld [vmem:[%s3 + $0x1a0] sm:$0xf]
    %v866 = vld [vmem:[%s3 + $0x1a4] sm:$0xff]
    %v867 = vld [vmem:[%s3 + $0x1ac] sm:$0xf]
    %v868 = vld [vmem:[%s3 + $0x1b0] sm:$0xff]
    %v869 = vld [vmem:[%s3 + $0x1b8] sm:$0xf]
    %v870 = vld [vmem:[%s3 + $0x1bc] sm:$0xff]
    %v871 = vld [vmem:[%s3 + $0x1c4] sm:$0xf]
    %v872 = vld [vmem:[%s3 + $0x1c8] sm:$0xff]
    %v873 = vld [vmem:[%s3 + $0x1d0] sm:$0xf]
    %v874 = vld [vmem:[%s3 + $0x1d4] sm:$0xff]
    %v875 = vld [vmem:[%s3 + $0x1dc] sm:$0xf]
    %v876 = vld [vmem:[%s3 + $0x1e0] sm:$0xff]
    %v877 = vld [vmem:[%s3 + $0x1e8] sm:$0xf]
    %v878 = vld [vmem:[%s3 + $0x1ec] sm:$0xff]
    %v879 = vld [vmem:[%s3 + $0x1f4] sm:$0xf]
    %v880 = vld [vmem:[%s3 + $0x1f8] sm:$0xff]
    %v881 = vld [vmem:[%s3 + $0x200] sm:$0xf]
    %v882 = vld [vmem:[%s3 + $0x204] sm:$0xff]
    %v883 = vld [vmem:[%s3 + $0x20c] sm:$0xf]
    %v884 = vld [vmem:[%s3 + $0x210] sm:$0xff]
    %v885 = vld [vmem:[%s3 + $0x218] sm:$0xf]
    %v886 = vld [vmem:[%s3 + $0x21c] sm:$0xff]
    %v887 = vld [vmem:[%s3 + $0x224] sm:$0xf]
    %v888 = vld [vmem:[%s3 + $0x228] sm:$0xff]
    %v889 = vld [vmem:[%s3 + $0x230] sm:$0xf]
    %v890 = vld [vmem:[%s3 + $0x234] sm:$0xff]
    %v891 = vld [vmem:[%s3 + $0x23c] sm:$0xf]
    %v892 = vld [vmem:[%s4] sm:$0xff]
    %v893 = vld [vmem:[%s4 + $0x8] sm:$0xff]
    %v894 = vld [vmem:[%s4 + $0x10] sm:$0xff]
    %v895 = vld [vmem:[%s4 + $0x18] sm:$0xff]
    %v896 = vld [vmem:[%s4 + $0x20] sm:$0xff]
    %v897 = vld [vmem:[%s4 + $0x28] sm:$0xff]
    %v898 = vld [vmem:[%s4 + $0x30] sm:$0xff]
    %v899 = vld [vmem:[%s4 + $0x38] sm:$0xff]
    %v900 = vld [vmem:[%s4 + $0x40] sm:$0xff]
    %v901 = vld [vmem:[%s4 + $0x48] sm:$0xff]
    %v902 = vld [vmem:[%s4 + $0x50] sm:$0xff]
    %v903 = vld [vmem:[%s4 + $0x58] sm:$0xff]
    %v904 = vld [vmem:[%s4 + $0x60] sm:$0xff]
    %v905 = vld [vmem:[%s4 + $0x68] sm:$0xff]
    %v906 = vld [vmem:[%s4 + $0x70] sm:$0xff]
    %v907 = vld [vmem:[%s4 + $0x78] sm:$0xff]
    %v908 = vld [vmem:[%s4 + $0x80] sm:$0xff]
    %v909 = vld [vmem:[%s4 + $0x88] sm:$0xff]
    %v910 = vld [vmem:[%s4 + $0x90] sm:$0xff]
    %v911 = vld [vmem:[%s4 + $0x98] sm:$0xff]
    %v912 = vld [vmem:[%s4 + $0xa0] sm:$0xff]
    %v913 = vld [vmem:[%s4 + $0xa8] sm:$0xff]
    %v914 = vld [vmem:[%s4 + $0xb0] sm:$0xff]
    %v915 = vld [vmem:[%s4 + $0xb8] sm:$0xff]
    %v916 = vld [vmem:[%s4 + $0xc0] sm:$0xff]
    %v917 = vld [vmem:[%s4 + $0xc8] sm:$0xff]
    %v918 = vld [vmem:[%s4 + $0xd0] sm:$0xff]
    %v919 = vld [vmem:[%s4 + $0xd8] sm:$0xff]
    %v920 = vld [vmem:[%s4 + $0xe0] sm:$0xff]
    %v921 = vld [vmem:[%s4 + $0xe8] sm:$0xff]
    %v922 = vld [vmem:[%s4 + $0xf0] sm:$0xff]
    %v923 = vld [vmem:[%s4 + $0xf8] sm:$0xff]
    %v924 = vld [vmem:[%s4 + $0x100] sm:$0xff]
    %v925 = vld [vmem:[%s4 + $0x108] sm:$0xff]
    %v926 = vld [vmem:[%s4 + $0x110] sm:$0xff]
    %v927 = vld [vmem:[%s4 + $0x118] sm:$0xff]
    %v928 = vld [vmem:[%s4 + $0x120] sm:$0xff]
    %v929 = vld [vmem:[%s4 + $0x128] sm:$0xff]
    %v930 = vld [vmem:[%s4 + $0x130] sm:$0xff]
    %v931 = vld [vmem:[%s4 + $0x138] sm:$0xff]
    %v932 = vld [vmem:[%s4 + $0x140] sm:$0xff]
    %v933 = vld [vmem:[%s4 + $0x148] sm:$0xff]
    %v934 = vld [vmem:[%s4 + $0x150] sm:$0xff]
    %v935 = vld [vmem:[%s4 + $0x158] sm:$0xff]
    %v936 = vld [vmem:[%s4 + $0x160] sm:$0xff]
    %v937 = vld [vmem:[%s4 + $0x168] sm:$0xff]
    %v938 = vld [vmem:[%s4 + $0x170] sm:$0xff]
    %v939 = vld [vmem:[%s4 + $0x178] sm:$0xff]
    %941 = vset.pattern.permute.xlu0 0
    %942 = vperm.xlu0 %941, %v892
    %v943 = vpop.permute.xlu0 %942
    %946 = vset.pattern.permute.xlu0 0
    %947 = vperm.xlu0 %946, %v893
    %v948 = vpop.permute.xlu0 %947
    %951 = vset.pattern.permute.xlu0 0
    %952 = vperm.xlu0 %951, %v894
    %v953 = vpop.permute.xlu0 %952
    %956 = vset.pattern.permute.xlu0 0
    %957 = vperm.xlu0 %956, %v895
    %v958 = vpop.permute.xlu0 %957
    %961 = vset.pattern.permute.xlu0 0
    %962 = vperm.xlu0 %961, %v896
    %v963 = vpop.permute.xlu0 %962
    %966 = vset.pattern.permute.xlu0 0
    %967 = vperm.xlu0 %966, %v897
    %v968 = vpop.permute.xlu0 %967
    %971 = vset.pattern.permute.xlu0 0
    %972 = vperm.xlu0 %971, %v898
    %v973 = vpop.permute.xlu0 %972
    %976 = vset.pattern.permute.xlu0 0
    %977 = vperm.xlu0 %976, %v899
    %v978 = vpop.permute.xlu0 %977
    %981 = vset.pattern.permute.xlu0 0
    %982 = vperm.xlu0 %981, %v900
    %v983 = vpop.permute.xlu0 %982
    %986 = vset.pattern.permute.xlu0 0
    %987 = vperm.xlu0 %986, %v901
    %v988 = vpop.permute.xlu0 %987
    %991 = vset.pattern.permute.xlu0 0
    %992 = vperm.xlu0 %991, %v902
    %v993 = vpop.permute.xlu0 %992
    %996 = vset.pattern.permute.xlu0 0
    %997 = vperm.xlu0 %996, %v903
    %v998 = vpop.permute.xlu0 %997
    %1001 = vset.pattern.permute.xlu0 0
    %1002 = vperm.xlu0 %1001, %v904
    %v1003 = vpop.permute.xlu0 %1002
    %1006 = vset.pattern.permute.xlu0 0
    %1007 = vperm.xlu0 %1006, %v905
    %v1008 = vpop.permute.xlu0 %1007
    %1011 = vset.pattern.permute.xlu0 0
    %1012 = vperm.xlu0 %1011, %v906
    %v1013 = vpop.permute.xlu0 %1012
    %1016 = vset.pattern.permute.xlu0 0
    %1017 = vperm.xlu0 %1016, %v907
    %v1018 = vpop.permute.xlu0 %1017
    %1021 = vset.pattern.permute.xlu0 0
    %1022 = vperm.xlu0 %1021, %v908
    %v1023 = vpop.permute.xlu0 %1022
    %1026 = vset.pattern.permute.xlu0 0
    %1027 = vperm.xlu0 %1026, %v909
    %v1028 = vpop.permute.xlu0 %1027
    %1031 = vset.pattern.permute.xlu0 0
    %1032 = vperm.xlu0 %1031, %v910
    %v1033 = vpop.permute.xlu0 %1032
    %1036 = vset.pattern.permute.xlu0 0
    %1037 = vperm.xlu0 %1036, %v911
    %v1038 = vpop.permute.xlu0 %1037
    %1041 = vset.pattern.permute.xlu0 0
    %1042 = vperm.xlu0 %1041, %v912
    %v1043 = vpop.permute.xlu0 %1042
    %1046 = vset.pattern.permute.xlu0 0
    %1047 = vperm.xlu0 %1046, %v913
    %v1048 = vpop.permute.xlu0 %1047
    %1051 = vset.pattern.permute.xlu0 0
    %1052 = vperm.xlu0 %1051, %v914
    %v1053 = vpop.permute.xlu0 %1052
    %1056 = vset.pattern.permute.xlu0 0
    %1057 = vperm.xlu0 %1056, %v915
    %v1058 = vpop.permute.xlu0 %1057
    %1061 = vset.pattern.permute.xlu0 0
    %1062 = vperm.xlu0 %1061, %v916
    %v1063 = vpop.permute.xlu0 %1062
    %1066 = vset.pattern.permute.xlu0 0
    %1067 = vperm.xlu0 %1066, %v917
    %v1068 = vpop.permute.xlu0 %1067
    %1071 = vset.pattern.permute.xlu0 0
    %1072 = vperm.xlu0 %1071, %v918
    %v1073 = vpop.permute.xlu0 %1072
    %1076 = vset.pattern.permute.xlu0 0
    %1077 = vperm.xlu0 %1076, %v919
    %v1078 = vpop.permute.xlu0 %1077
    %1081 = vset.pattern.permute.xlu0 0
    %1082 = vperm.xlu0 %1081, %v920
    %v1083 = vpop.permute.xlu0 %1082
    %1086 = vset.pattern.permute.xlu0 0
    %1087 = vperm.xlu0 %1086, %v921
    %v1088 = vpop.permute.xlu0 %1087
    %1091 = vset.pattern.permute.xlu0 0
    %1092 = vperm.xlu0 %1091, %v922
    %v1093 = vpop.permute.xlu0 %1092
    %1096 = vset.pattern.permute.xlu0 0
    %1097 = vperm.xlu0 %1096, %v923
    %v1098 = vpop.permute.xlu0 %1097
    %1101 = vset.pattern.permute.xlu0 0
    %1102 = vperm.xlu0 %1101, %v924
    %v1103 = vpop.permute.xlu0 %1102
    %1106 = vset.pattern.permute.xlu0 0
    %1107 = vperm.xlu0 %1106, %v925
    %v1108 = vpop.permute.xlu0 %1107
    %1111 = vset.pattern.permute.xlu0 0
    %1112 = vperm.xlu0 %1111, %v926
    %v1113 = vpop.permute.xlu0 %1112
    %1116 = vset.pattern.permute.xlu0 0
    %1117 = vperm.xlu0 %1116, %v927
    %v1118 = vpop.permute.xlu0 %1117
    %1121 = vset.pattern.permute.xlu0 0
    %1122 = vperm.xlu0 %1121, %v928
    %v1123 = vpop.permute.xlu0 %1122
    %1126 = vset.pattern.permute.xlu0 0
    %1127 = vperm.xlu0 %1126, %v929
    %v1128 = vpop.permute.xlu0 %1127
    %1131 = vset.pattern.permute.xlu0 0
    %1132 = vperm.xlu0 %1131, %v930
    %v1133 = vpop.permute.xlu0 %1132
    %1136 = vset.pattern.permute.xlu0 0
    %1137 = vperm.xlu0 %1136, %v931
    %v1138 = vpop.permute.xlu0 %1137
    %1141 = vset.pattern.permute.xlu0 0
    %1142 = vperm.xlu0 %1141, %v932
    %v1143 = vpop.permute.xlu0 %1142
    %1146 = vset.pattern.permute.xlu0 0
    %1147 = vperm.xlu0 %1146, %v933
    %v1148 = vpop.permute.xlu0 %1147
    %1151 = vset.pattern.permute.xlu0 0
    %1152 = vperm.xlu0 %1151, %v934
    %v1153 = vpop.permute.xlu0 %1152
    %1156 = vset.pattern.permute.xlu0 0
    %1157 = vperm.xlu0 %1156, %v935
    %v1158 = vpop.permute.xlu0 %1157
    %1161 = vset.pattern.permute.xlu0 0
    %1162 = vperm.xlu0 %1161, %v936
    %v1163 = vpop.permute.xlu0 %1162
    %1166 = vset.pattern.permute.xlu0 0
    %1167 = vperm.xlu0 %1166, %v937
    %v1168 = vpop.permute.xlu0 %1167
    %1171 = vset.pattern.permute.xlu0 0
    %1172 = vperm.xlu0 %1171, %v938
    %v1173 = vpop.permute.xlu0 %1172
    %1176 = vset.pattern.permute.xlu0 0
    %1177 = vperm.xlu0 %1176, %v939
    %v1178 = vpop.permute.xlu0 %1177
    %v1276 = vunpack.c.l.b16 %v796
    %v1277 = vunpack.c.h.b16 %v796
    %v1278 = vunpack.c.l.b16 %v797
    %v1279 = vunpack.c.l.b16 %v798
    %v1280 = vunpack.c.h.b16 %v798
    %v1281 = vunpack.c.l.b16 %v799
    %v1282 = vunpack.c.l.b16 %v800
    %v1283 = vunpack.c.h.b16 %v800
    %v1284 = vunpack.c.l.b16 %v801
    %v1285 = vunpack.c.l.b16 %v802
    %v1286 = vunpack.c.h.b16 %v802
    %v1287 = vunpack.c.l.b16 %v803
    %v1288 = vunpack.c.l.b16 %v804
    %v1289 = vunpack.c.h.b16 %v804
    %v1290 = vunpack.c.l.b16 %v805
    %v1291 = vunpack.c.l.b16 %v806
    %v1292 = vunpack.c.h.b16 %v806
    %v1293 = vunpack.c.l.b16 %v807
    %v1294 = vunpack.c.l.b16 %v808
    %v1295 = vunpack.c.h.b16 %v808
    %v1296 = vunpack.c.l.b16 %v809
    %v1297 = vunpack.c.l.b16 %v810
    %v1298 = vunpack.c.h.b16 %v810
    %v1299 = vunpack.c.l.b16 %v811
    %v1300 = vunpack.c.l.b16 %v812
    %v1301 = vunpack.c.h.b16 %v812
    %v1302 = vunpack.c.l.b16 %v813
    %v1303 = vunpack.c.l.b16 %v814
    %v1304 = vunpack.c.h.b16 %v814
    %v1305 = vunpack.c.l.b16 %v815
    %v1306 = vunpack.c.l.b16 %v816
    %v1307 = vunpack.c.h.b16 %v816
    %v1308 = vunpack.c.l.b16 %v817
    %v1309 = vunpack.c.l.b16 %v818
    %v1310 = vunpack.c.h.b16 %v818
    %v1311 = vunpack.c.l.b16 %v819
    %v1312 = vunpack.c.l.b16 %v820
    %v1313 = vunpack.c.h.b16 %v820
    %v1314 = vunpack.c.l.b16 %v821
    %v1315 = vunpack.c.l.b16 %v822
    %v1316 = vunpack.c.h.b16 %v822
    %v1317 = vunpack.c.l.b16 %v823
    %v1318 = vunpack.c.l.b16 %v824
    %v1319 = vunpack.c.h.b16 %v824
    %v1320 = vunpack.c.l.b16 %v825
    %v1321 = vunpack.c.l.b16 %v826
    %v1322 = vunpack.c.h.b16 %v826
    %v1323 = vunpack.c.l.b16 %v827
    %v1324 = vunpack.c.l.b16 %v828
    %v1325 = vunpack.c.h.b16 %v828
    %v1326 = vunpack.c.l.b16 %v829
    %v1327 = vunpack.c.l.b16 %v830
    %v1328 = vunpack.c.h.b16 %v830
    %v1329 = vunpack.c.l.b16 %v831
    %v1330 = vunpack.c.l.b16 %v832
    %v1331 = vunpack.c.h.b16 %v832
    %v1332 = vunpack.c.l.b16 %v833
    %v1333 = vunpack.c.l.b16 %v834
    %v1334 = vunpack.c.h.b16 %v834
    %v1335 = vunpack.c.l.b16 %v835
    %v1336 = vunpack.c.l.b16 %v836
    %v1337 = vunpack.c.h.b16 %v836
    %v1338 = vunpack.c.l.b16 %v837
    %v1339 = vunpack.c.l.b16 %v838
    %v1340 = vunpack.c.h.b16 %v838
    %v1341 = vunpack.c.l.b16 %v839
    %v1342 = vunpack.c.l.b16 %v840
    %v1343 = vunpack.c.h.b16 %v840
    %v1344 = vunpack.c.l.b16 %v841
    %v1345 = vunpack.c.l.b16 %v842
    %v1346 = vunpack.c.h.b16 %v842
    %v1347 = vunpack.c.l.b16 %v843
    %v1348 = vunpack.c.l.b16 %v844
    %v1349 = vunpack.c.h.b16 %v844
    %v1350 = vunpack.c.l.b16 %v845
    %v1351 = vunpack.c.l.b16 %v846
    %v1352 = vunpack.c.h.b16 %v846
    %v1353 = vunpack.c.l.b16 %v847
    %v1354 = vunpack.c.l.b16 %v848
    %v1355 = vunpack.c.h.b16 %v848
    %v1356 = vunpack.c.l.b16 %v849
    %v1357 = vunpack.c.l.b16 %v850
    %v1358 = vunpack.c.h.b16 %v850
    %v1359 = vunpack.c.l.b16 %v851
    %v1360 = vunpack.c.l.b16 %v852
    %v1361 = vunpack.c.h.b16 %v852
    %v1362 = vunpack.c.l.b16 %v853
    %v1363 = vunpack.c.l.b16 %v854
    %v1364 = vunpack.c.h.b16 %v854
    %v1365 = vunpack.c.l.b16 %v855
    %v1366 = vunpack.c.l.b16 %v856
    %v1367 = vunpack.c.h.b16 %v856
    %v1368 = vunpack.c.l.b16 %v857
    %v1369 = vunpack.c.l.b16 %v858
    %v1370 = vunpack.c.h.b16 %v858
    %v1371 = vunpack.c.l.b16 %v859
    %v1372 = vunpack.c.l.b16 %v860
    %v1373 = vunpack.c.h.b16 %v860
    %v1374 = vunpack.c.l.b16 %v861
    %v1375 = vunpack.c.l.b16 %v862
    %v1376 = vunpack.c.h.b16 %v862
    %v1377 = vunpack.c.l.b16 %v863
    %v1378 = vunpack.c.l.b16 %v864
    %v1379 = vunpack.c.h.b16 %v864
    %v1380 = vunpack.c.l.b16 %v865
    %v1381 = vunpack.c.l.b16 %v866
    %v1382 = vunpack.c.h.b16 %v866
    %v1383 = vunpack.c.l.b16 %v867
    %v1384 = vunpack.c.l.b16 %v868
    %v1385 = vunpack.c.h.b16 %v868
    %v1386 = vunpack.c.l.b16 %v869
    %v1387 = vunpack.c.l.b16 %v870
    %v1388 = vunpack.c.h.b16 %v870
    %v1389 = vunpack.c.l.b16 %v871
    %v1390 = vunpack.c.l.b16 %v872
    %v1391 = vunpack.c.h.b16 %v872
    %v1392 = vunpack.c.l.b16 %v873
    %v1393 = vunpack.c.l.b16 %v874
    %v1394 = vunpack.c.h.b16 %v874
    %v1395 = vunpack.c.l.b16 %v875
    %v1396 = vunpack.c.l.b16 %v876
    %v1397 = vunpack.c.h.b16 %v876
    %v1398 = vunpack.c.l.b16 %v877
    %v1399 = vunpack.c.l.b16 %v878
    %v1400 = vunpack.c.h.b16 %v878
    %v1401 = vunpack.c.l.b16 %v879
    %v1402 = vunpack.c.l.b16 %v880
    %v1403 = vunpack.c.h.b16 %v880
    %v1404 = vunpack.c.l.b16 %v881
    %v1405 = vunpack.c.l.b16 %v882
    %v1406 = vunpack.c.h.b16 %v882
    %v1407 = vunpack.c.l.b16 %v883
    %v1408 = vunpack.c.l.b16 %v884
    %v1409 = vunpack.c.h.b16 %v884
    %v1410 = vunpack.c.l.b16 %v885
    %v1411 = vunpack.c.l.b16 %v886
    %v1412 = vunpack.c.h.b16 %v886
    %v1413 = vunpack.c.l.b16 %v887
    %v1414 = vunpack.c.l.b16 %v888
    %v1415 = vunpack.c.h.b16 %v888
    %v1416 = vunpack.c.l.b16 %v889
    %v1417 = vunpack.c.l.b16 %v890
    %v1418 = vunpack.c.h.b16 %v890
    %v1419 = vunpack.c.l.b16 %v891
    %v1420 = vpack.c.b16 %v1279, %v1276
    %v1421 = vpack.c.b16 %v1280, %v1277
    %v1422 = vpack.c.b16 %v1281, %v1278
    %v1423 = vpack.c.b16 %v1285, %v1282
    %v1424 = vpack.c.b16 %v1286, %v1283
    %v1425 = vpack.c.b16 %v1287, %v1284
    %v1426 = vpack.c.b16 %v1291, %v1288
    %v1427 = vpack.c.b16 %v1292, %v1289
    %v1428 = vpack.c.b16 %v1293, %v1290
    %v1429 = vpack.c.b16 %v1297, %v1294
    %v1430 = vpack.c.b16 %v1298, %v1295
    %v1431 = vpack.c.b16 %v1299, %v1296
    %v1432 = vpack.c.b16 %v1303, %v1300
    %v1433 = vpack.c.b16 %v1304, %v1301
    %v1434 = vpack.c.b16 %v1305, %v1302
    %v1435 = vpack.c.b16 %v1309, %v1306
    %v1436 = vpack.c.b16 %v1310, %v1307
    %v1437 = vpack.c.b16 %v1311, %v1308
    %v1438 = vpack.c.b16 %v1315, %v1312
    %v1439 = vpack.c.b16 %v1316, %v1313
    %v1440 = vpack.c.b16 %v1317, %v1314
    %v1441 = vpack.c.b16 %v1321, %v1318
    %v1442 = vpack.c.b16 %v1322, %v1319
    %v1443 = vpack.c.b16 %v1323, %v1320
    %v1444 = vpack.c.b16 %v1327, %v1324
    %v1445 = vpack.c.b16 %v1328, %v1325
    %v1446 = vpack.c.b16 %v1329, %v1326
    %v1447 = vpack.c.b16 %v1333, %v1330
    %v1448 = vpack.c.b16 %v1334, %v1331
    %v1449 = vpack.c.b16 %v1335, %v1332
    %v1450 = vpack.c.b16 %v1339, %v1336
    %v1451 = vpack.c.b16 %v1340, %v1337
    %v1452 = vpack.c.b16 %v1341, %v1338
    %v1453 = vpack.c.b16 %v1345, %v1342
    %v1454 = vpack.c.b16 %v1346, %v1343
    %v1455 = vpack.c.b16 %v1347, %v1344
    %v1456 = vpack.c.b16 %v1351, %v1348
    %v1457 = vpack.c.b16 %v1352, %v1349
    %v1458 = vpack.c.b16 %v1353, %v1350
    %v1459 = vpack.c.b16 %v1357, %v1354
    %v1460 = vpack.c.b16 %v1358, %v1355
    %v1461 = vpack.c.b16 %v1359, %v1356
    %v1462 = vpack.c.b16 %v1363, %v1360
    %v1463 = vpack.c.b16 %v1364, %v1361
    %v1464 = vpack.c.b16 %v1365, %v1362
    %v1465 = vpack.c.b16 %v1369, %v1366
    %v1466 = vpack.c.b16 %v1370, %v1367
    %v1467 = vpack.c.b16 %v1371, %v1368
    %v1468 = vpack.c.b16 %v1375, %v1372
    %v1469 = vpack.c.b16 %v1376, %v1373
    %v1470 = vpack.c.b16 %v1377, %v1374
    %v1471 = vpack.c.b16 %v1381, %v1378
    %v1472 = vpack.c.b16 %v1382, %v1379
    %v1473 = vpack.c.b16 %v1383, %v1380
    %v1474 = vpack.c.b16 %v1387, %v1384
    %v1475 = vpack.c.b16 %v1388, %v1385
    %v1476 = vpack.c.b16 %v1389, %v1386
    %v1477 = vpack.c.b16 %v1393, %v1390
    %v1478 = vpack.c.b16 %v1394, %v1391
    %v1479 = vpack.c.b16 %v1395, %v1392
    %v1480 = vpack.c.b16 %v1399, %v1396
    %v1481 = vpack.c.b16 %v1400, %v1397
    %v1482 = vpack.c.b16 %v1401, %v1398
    %v1483 = vpack.c.b16 %v1405, %v1402
    %v1484 = vpack.c.b16 %v1406, %v1403
    %v1485 = vpack.c.b16 %v1407, %v1404
    %v1486 = vpack.c.b16 %v1411, %v1408
    %v1487 = vpack.c.b16 %v1412, %v1409
    %v1488 = vpack.c.b16 %v1413, %v1410
    %v1489 = vpack.c.b16 %v1417, %v1414
    %v1490 = vpack.c.b16 %v1418, %v1415
    %v1491 = vpack.c.b16 %v1419, %v1416
    %1564 = vmatpush.bf16.msra.mxu0 %v779
    %1565 = vmatpush.bf16.msra.mxu0 %v778
    %1566 = vmatpush.bf16.msra.mxu0 %v777
    %1567 = vmatpush.bf16.msra.mxu0 %v776
    %1568 = vmatpush.bf16.msra.mxu0 %v775
    %1569 = vmatpush.bf16.msra.mxu0 %v774
    %1570 = vmatpush.bf16.msra.mxu0 %v773
    %1571 = vmatpush.bf16.msra.mxu0 %v772
    %1572 = vmatmul.bf16.gmra.mxu0 %v1420
    %v1573 = vpop.f32.mrf.mxu0
    %v1574 = vadd.f32 %v943, %v1573
    %v1575 = vpop.f32.mrf.mxu0
    %v1576 = vadd.f32 %v948, %v1575
    %1577 = vmatmul.bf16.gmra.mxu0 %v1423
    %v1578 = vpop.f32.mrf.mxu0
    %v1579 = vadd.f32 %v953, %v1578
    %v1580 = vpop.f32.mrf.mxu0
    %v1581 = vadd.f32 %v958, %v1580
    %1582 = vmatmul.bf16.gmra.mxu0 %v1426
    %v1583 = vpop.f32.mrf.mxu0
    %v1584 = vadd.f32 %v963, %v1583
    %v1585 = vpop.f32.mrf.mxu0
    %v1586 = vadd.f32 %v968, %v1585
    %1587 = vmatmul.bf16.gmra.mxu0 %v1429
    %v1588 = vpop.f32.mrf.mxu0
    %v1589 = vadd.f32 %v973, %v1588
    %v1590 = vpop.f32.mrf.mxu0
    %v1591 = vadd.f32 %v978, %v1590
    %1592 = vmatmul.bf16.gmra.mxu0 %v1432
    %v1593 = vpop.f32.mrf.mxu0
    %v1594 = vadd.f32 %v983, %v1593
    %v1595 = vpop.f32.mrf.mxu0
    %v1596 = vadd.f32 %v988, %v1595
    %1597 = vmatmul.bf16.gmra.mxu0 %v1435
    %v1598 = vpop.f32.mrf.mxu0
    %v1599 = vadd.f32 %v993, %v1598
    %v1600 = vpop.f32.mrf.mxu0
    %v1601 = vadd.f32 %v998, %v1600
    %1602 = vmatmul.bf16.gmra.mxu0 %v1438
    %v1603 = vpop.f32.mrf.mxu0
    %v1604 = vadd.f32 %v1003, %v1603
    %v1605 = vpop.f32.mrf.mxu0
    %v1606 = vadd.f32 %v1008, %v1605
    %1607 = vmatmul.bf16.gmra.mxu0 %v1441
    %v1608 = vpop.f32.mrf.mxu0
    %v1609 = vadd.f32 %v1013, %v1608
    %v1610 = vpop.f32.mrf.mxu0
    %v1611 = vadd.f32 %v1018, %v1610
    %1612 = vmatmul.bf16.gmra.mxu0 %v1444
    %v1613 = vpop.f32.mrf.mxu0
    %v1614 = vadd.f32 %v1023, %v1613
    %v1615 = vpop.f32.mrf.mxu0
    %v1616 = vadd.f32 %v1028, %v1615
    %1617 = vmatmul.bf16.gmra.mxu0 %v1447
    %v1618 = vpop.f32.mrf.mxu0
    %v1619 = vadd.f32 %v1033, %v1618
    %v1620 = vpop.f32.mrf.mxu0
    %v1621 = vadd.f32 %v1038, %v1620
    %1622 = vmatmul.bf16.gmra.mxu0 %v1450
    %v1623 = vpop.f32.mrf.mxu0
    %v1624 = vadd.f32 %v1043, %v1623
    %v1625 = vpop.f32.mrf.mxu0
    %v1626 = vadd.f32 %v1048, %v1625
    %1627 = vmatmul.bf16.gmra.mxu0 %v1453
    %v1628 = vpop.f32.mrf.mxu0
    %v1629 = vadd.f32 %v1053, %v1628
    %v1630 = vpop.f32.mrf.mxu0
    %v1631 = vadd.f32 %v1058, %v1630
    %1632 = vmatmul.bf16.gmra.mxu0 %v1456
    %v1633 = vpop.f32.mrf.mxu0
    %v1634 = vadd.f32 %v1063, %v1633
    %v1635 = vpop.f32.mrf.mxu0
    %v1636 = vadd.f32 %v1068, %v1635
    %1637 = vmatmul.bf16.gmra.mxu0 %v1459
    %v1638 = vpop.f32.mrf.mxu0
    %v1639 = vadd.f32 %v1073, %v1638
    %v1640 = vpop.f32.mrf.mxu0
    %v1641 = vadd.f32 %v1078, %v1640
    %1642 = vmatmul.bf16.gmra.mxu0 %v1462
    %v1643 = vpop.f32.mrf.mxu0
    %v1644 = vadd.f32 %v1083, %v1643
    %v1645 = vpop.f32.mrf.mxu0
    %v1646 = vadd.f32 %v1088, %v1645
    %1647 = vmatmul.bf16.gmra.mxu0 %v1465
    %v1648 = vpop.f32.mrf.mxu0
    %v1649 = vadd.f32 %v1093, %v1648
    %v1650 = vpop.f32.mrf.mxu0
    %v1651 = vadd.f32 %v1098, %v1650
    %1652 = vmatmul.bf16.gmra.mxu0 %v1468
    %v1653 = vpop.f32.mrf.mxu0
    %v1654 = vadd.f32 %v1103, %v1653
    %v1655 = vpop.f32.mrf.mxu0
    %v1656 = vadd.f32 %v1108, %v1655
    %1657 = vmatmul.bf16.gmra.mxu0 %v1471
    %v1658 = vpop.f32.mrf.mxu0
    %v1659 = vadd.f32 %v1113, %v1658
    %v1660 = vpop.f32.mrf.mxu0
    %v1661 = vadd.f32 %v1118, %v1660
    %1662 = vmatmul.bf16.gmra.mxu0 %v1474
    %v1663 = vpop.f32.mrf.mxu0
    %v1664 = vadd.f32 %v1123, %v1663
    %v1665 = vpop.f32.mrf.mxu0
    %v1666 = vadd.f32 %v1128, %v1665
    %1667 = vmatmul.bf16.gmra.mxu0 %v1477
    %v1668 = vpop.f32.mrf.mxu0
    %v1669 = vadd.f32 %v1133, %v1668
    %v1670 = vpop.f32.mrf.mxu0
    %v1671 = vadd.f32 %v1138, %v1670
    %1672 = vmatmul.bf16.gmra.mxu0 %v1480
    %v1673 = vpop.f32.mrf.mxu0
    %v1674 = vadd.f32 %v1143, %v1673
    %v1675 = vpop.f32.mrf.mxu0
    %v1676 = vadd.f32 %v1148, %v1675
    %1677 = vmatmul.bf16.gmra.mxu0 %v1483
    %v1678 = vpop.f32.mrf.mxu0
    %v1679 = vadd.f32 %v1153, %v1678
    %v1680 = vpop.f32.mrf.mxu0
    %v1681 = vadd.f32 %v1158, %v1680
    %1682 = vmatmul.bf16.gmra.mxu0 %v1486
    %v1683 = vpop.f32.mrf.mxu0
    %v1684 = vadd.f32 %v1163, %v1683
    %v1685 = vpop.f32.mrf.mxu0
    %v1686 = vadd.f32 %v1168, %v1685
    %1687 = vmatmul.bf16.gmra.mxu0 %v1489
    %v1688 = vpop.f32.mrf.mxu0
    %v1689 = vadd.f32 %v1173, %v1688
    %v1690 = vpop.f32.mrf.mxu0
    %v1691 = vadd.f32 %v1178, %v1690
    %1692 = vdwg.mxu0
    %1693 = vmatpush.bf16.msra.mxu0 %v787
    %1694 = vmatpush.bf16.msra.mxu0 %v786
    %1695 = vmatpush.bf16.msra.mxu0 %v785
    %1696 = vmatpush.bf16.msra.mxu0 %v784
    %1697 = vmatpush.bf16.msra.mxu0 %v783
    %1698 = vmatpush.bf16.msra.mxu0 %v782
    %1699 = vmatpush.bf16.msra.mxu0 %v781
    %1700 = vmatpush.bf16.msra.mxu0 %v780
    %1701 = vmatmul.bf16.gmra.mxu0 %v1421
    %v1702 = vpop.f32.mrf.mxu0
    %v1703 = vadd.f32 %v1574, %v1702
    %v1704 = vpop.f32.mrf.mxu0
    %v1705 = vadd.f32 %v1576, %v1704
    %1706 = vmatmul.bf16.gmra.mxu0 %v1424
    %v1707 = vpop.f32.mrf.mxu0
    %v1708 = vadd.f32 %v1579, %v1707
    %v1709 = vpop.f32.mrf.mxu0
    %v1710 = vadd.f32 %v1581, %v1709
    %1711 = vmatmul.bf16.gmra.mxu0 %v1427
    %v1712 = vpop.f32.mrf.mxu0
    %v1713 = vadd.f32 %v1584, %v1712
    %v1714 = vpop.f32.mrf.mxu0
    %v1715 = vadd.f32 %v1586, %v1714
    %1716 = vmatmul.bf16.gmra.mxu0 %v1430
    %v1717 = vpop.f32.mrf.mxu0
    %v1718 = vadd.f32 %v1589, %v1717
    %v1719 = vpop.f32.mrf.mxu0
    %v1720 = vadd.f32 %v1591, %v1719
    %1721 = vmatmul.bf16.gmra.mxu0 %v1433
    %v1722 = vpop.f32.mrf.mxu0
    %v1723 = vadd.f32 %v1594, %v1722
    %v1724 = vpop.f32.mrf.mxu0
    %v1725 = vadd.f32 %v1596, %v1724
    %1726 = vmatmul.bf16.gmra.mxu0 %v1436
    %v1727 = vpop.f32.mrf.mxu0
    %v1728 = vadd.f32 %v1599, %v1727
    %v1729 = vpop.f32.mrf.mxu0
    %v1730 = vadd.f32 %v1601, %v1729
    %1731 = vmatmul.bf16.gmra.mxu0 %v1439
    %v1732 = vpop.f32.mrf.mxu0
    %v1733 = vadd.f32 %v1604, %v1732
    %v1734 = vpop.f32.mrf.mxu0
    %v1735 = vadd.f32 %v1606, %v1734
    %1736 = vmatmul.bf16.gmra.mxu0 %v1442
    %v1737 = vpop.f32.mrf.mxu0
    %v1738 = vadd.f32 %v1609, %v1737
    %v1739 = vpop.f32.mrf.mxu0
    %v1740 = vadd.f32 %v1611, %v1739
    %1741 = vmatmul.bf16.gmra.mxu0 %v1445
    %v1742 = vpop.f32.mrf.mxu0
    %v1743 = vadd.f32 %v1614, %v1742
    %v1744 = vpop.f32.mrf.mxu0
    %v1745 = vadd.f32 %v1616, %v1744
    %1746 = vmatmul.bf16.gmra.mxu0 %v1448
    %v1747 = vpop.f32.mrf.mxu0
    %v1748 = vadd.f32 %v1619, %v1747
    %v1749 = vpop.f32.mrf.mxu0
    %v1750 = vadd.f32 %v1621, %v1749
    %1751 = vmatmul.bf16.gmra.mxu0 %v1451
    %v1752 = vpop.f32.mrf.mxu0
    %v1753 = vadd.f32 %v1624, %v1752
    %v1754 = vpop.f32.mrf.mxu0
    %v1755 = vadd.f32 %v1626, %v1754
    %1756 = vmatmul.bf16.gmra.mxu0 %v1454
    %v1757 = vpop.f32.mrf.mxu0
    %v1758 = vadd.f32 %v1629, %v1757
    %v1759 = vpop.f32.mrf.mxu0
    %v1760 = vadd.f32 %v1631, %v1759
    %1761 = vmatmul.bf16.gmra.mxu0 %v1457
    %v1762 = vpop.f32.mrf.mxu0
    %v1763 = vadd.f32 %v1634, %v1762
    %v1764 = vpop.f32.mrf.mxu0
    %v1765 = vadd.f32 %v1636, %v1764
    %1766 = vmatmul.bf16.gmra.mxu0 %v1460
    %v1767 = vpop.f32.mrf.mxu0
    %v1768 = vadd.f32 %v1639, %v1767
    %v1769 = vpop.f32.mrf.mxu0
    %v1770 = vadd.f32 %v1641, %v1769
    %1771 = vmatmul.bf16.gmra.mxu0 %v1463
    %v1772 = vpop.f32.mrf.mxu0
    %v1773 = vadd.f32 %v1644, %v1772
    %v1774 = vpop.f32.mrf.mxu0
    %v1775 = vadd.f32 %v1646, %v1774
    %1776 = vmatmul.bf16.gmra.mxu0 %v1466
    %v1777 = vpop.f32.mrf.mxu0
    %v1778 = vadd.f32 %v1649, %v1777
    %v1779 = vpop.f32.mrf.mxu0
    %v1780 = vadd.f32 %v1651, %v1779
    %1781 = vmatmul.bf16.gmra.mxu0 %v1469
    %v1782 = vpop.f32.mrf.mxu0
    %v1783 = vadd.f32 %v1654, %v1782
    %v1784 = vpop.f32.mrf.mxu0
    %v1785 = vadd.f32 %v1656, %v1784
    %1786 = vmatmul.bf16.gmra.mxu0 %v1472
    %v1787 = vpop.f32.mrf.mxu0
    %v1788 = vadd.f32 %v1659, %v1787
    %v1789 = vpop.f32.mrf.mxu0
    %v1790 = vadd.f32 %v1661, %v1789
    %1791 = vmatmul.bf16.gmra.mxu0 %v1475
    %v1792 = vpop.f32.mrf.mxu0
    %v1793 = vadd.f32 %v1664, %v1792
    %v1794 = vpop.f32.mrf.mxu0
    %v1795 = vadd.f32 %v1666, %v1794
    %1796 = vmatmul.bf16.gmra.mxu0 %v1478
    %v1797 = vpop.f32.mrf.mxu0
    %v1798 = vadd.f32 %v1669, %v1797
    %v1799 = vpop.f32.mrf.mxu0
    %v1800 = vadd.f32 %v1671, %v1799
    %1801 = vmatmul.bf16.gmra.mxu0 %v1481
    %v1802 = vpop.f32.mrf.mxu0
    %v1803 = vadd.f32 %v1674, %v1802
    %v1804 = vpop.f32.mrf.mxu0
    %v1805 = vadd.f32 %v1676, %v1804
    %1806 = vmatmul.bf16.gmra.mxu0 %v1484
    %v1807 = vpop.f32.mrf.mxu0
    %v1808 = vadd.f32 %v1679, %v1807
    %v1809 = vpop.f32.mrf.mxu0
    %v1810 = vadd.f32 %v1681, %v1809
    %1811 = vmatmul.bf16.gmra.mxu0 %v1487
    %v1812 = vpop.f32.mrf.mxu0
    %v1813 = vadd.f32 %v1684, %v1812
    %v1814 = vpop.f32.mrf.mxu0
    %v1815 = vadd.f32 %v1686, %v1814
    %1816 = vmatmul.bf16.gmra.mxu0 %v1490
    %v1817 = vpop.f32.mrf.mxu0
    %v1818 = vadd.f32 %v1689, %v1817
    %v1819 = vpop.f32.mrf.mxu0
    %v1820 = vadd.f32 %v1691, %v1819
    %1821 = vdwg.mxu0
    %1822 = vmatpush.bf16.msra.mxu0 %v795
    %1823 = vmatpush.bf16.msra.mxu0 %v794
    %1824 = vmatpush.bf16.msra.mxu0 %v793
    %1825 = vmatpush.bf16.msra.mxu0 %v792
    %1826 = vmatpush.bf16.msra.mxu0 %v791
    %1827 = vmatpush.bf16.msra.mxu0 %v790
    %1828 = vmatpush.bf16.msra.mxu0 %v789
    %1829 = vmatpush.bf16.msra.mxu0 %v788
    %1830 = vmatmul.bf16.gmra.mxu0 %v1422
    %v1831 = vpop.f32.mrf.mxu0
    %v1832 = vadd.f32 %v1703, %v1831
    %v1833 = vpop.f32.mrf.mxu0
    %v1834 = vadd.f32 %v1705, %v1833
    %1835 = vmatmul.bf16.gmra.mxu0 %v1425
    %v1836 = vpop.f32.mrf.mxu0
    %v1837 = vadd.f32 %v1708, %v1836
    %v1838 = vpop.f32.mrf.mxu0
    %v1839 = vadd.f32 %v1710, %v1838
    %1840 = vmatmul.bf16.gmra.mxu0 %v1428
    %v1841 = vpop.f32.mrf.mxu0
    %v1842 = vadd.f32 %v1713, %v1841
    %v1843 = vpop.f32.mrf.mxu0
    %v1844 = vadd.f32 %v1715, %v1843
    %1845 = vmatmul.bf16.gmra.mxu0 %v1431
    %v1846 = vpop.f32.mrf.mxu0
    %v1847 = vadd.f32 %v1718, %v1846
    %v1848 = vpop.f32.mrf.mxu0
    %v1849 = vadd.f32 %v1720, %v1848
    %1850 = vmatmul.bf16.gmra.mxu0 %v1434
    %v1851 = vpop.f32.mrf.mxu0
    %v1852 = vadd.f32 %v1723, %v1851
    %v1853 = vpop.f32.mrf.mxu0
    %v1854 = vadd.f32 %v1725, %v1853
    %1855 = vmatmul.bf16.gmra.mxu0 %v1437
    %v1856 = vpop.f32.mrf.mxu0
    %v1857 = vadd.f32 %v1728, %v1856
    %v1858 = vpop.f32.mrf.mxu0
    %v1859 = vadd.f32 %v1730, %v1858
    %1860 = vmatmul.bf16.gmra.mxu0 %v1440
    %v1861 = vpop.f32.mrf.mxu0
    %v1862 = vadd.f32 %v1733, %v1861
    %v1863 = vpop.f32.mrf.mxu0
    %v1864 = vadd.f32 %v1735, %v1863
    %1865 = vmatmul.bf16.gmra.mxu0 %v1443
    %v1866 = vpop.f32.mrf.mxu0
    %v1867 = vadd.f32 %v1738, %v1866
    %v1868 = vpop.f32.mrf.mxu0
    %v1869 = vadd.f32 %v1740, %v1868
    %1870 = vmatmul.bf16.gmra.mxu0 %v1446
    %v1871 = vpop.f32.mrf.mxu0
    %v1872 = vadd.f32 %v1743, %v1871
    %v1873 = vpop.f32.mrf.mxu0
    %v1874 = vadd.f32 %v1745, %v1873
    %1875 = vmatmul.bf16.gmra.mxu0 %v1449
    %v1876 = vpop.f32.mrf.mxu0
    %v1877 = vadd.f32 %v1748, %v1876
    %v1878 = vpop.f32.mrf.mxu0
    %v1879 = vadd.f32 %v1750, %v1878
    %1880 = vmatmul.bf16.gmra.mxu0 %v1452
    %v1881 = vpop.f32.mrf.mxu0
    %v1882 = vadd.f32 %v1753, %v1881
    %v1883 = vpop.f32.mrf.mxu0
    %v1884 = vadd.f32 %v1755, %v1883
    %1885 = vmatmul.bf16.gmra.mxu0 %v1455
    %v1886 = vpop.f32.mrf.mxu0
    %v1887 = vadd.f32 %v1758, %v1886
    %v1888 = vpop.f32.mrf.mxu0
    %v1889 = vadd.f32 %v1760, %v1888
    %1890 = vmatmul.bf16.gmra.mxu0 %v1458
    %v1891 = vpop.f32.mrf.mxu0
    %v1892 = vadd.f32 %v1763, %v1891
    %v1893 = vpop.f32.mrf.mxu0
    %v1894 = vadd.f32 %v1765, %v1893
    %1895 = vmatmul.bf16.gmra.mxu0 %v1461
    %v1896 = vpop.f32.mrf.mxu0
    %v1897 = vadd.f32 %v1768, %v1896
    %v1898 = vpop.f32.mrf.mxu0
    %v1899 = vadd.f32 %v1770, %v1898
    %1900 = vmatmul.bf16.gmra.mxu0 %v1464
    %v1901 = vpop.f32.mrf.mxu0
    %v1902 = vadd.f32 %v1773, %v1901
    %v1903 = vpop.f32.mrf.mxu0
    %v1904 = vadd.f32 %v1775, %v1903
    %1905 = vmatmul.bf16.gmra.mxu0 %v1467
    %v1906 = vpop.f32.mrf.mxu0
    %v1907 = vadd.f32 %v1778, %v1906
    %v1908 = vpop.f32.mrf.mxu0
    %v1909 = vadd.f32 %v1780, %v1908
    %1910 = vmatmul.bf16.gmra.mxu0 %v1470
    %v1911 = vpop.f32.mrf.mxu0
    %v1912 = vadd.f32 %v1783, %v1911
    %v1913 = vpop.f32.mrf.mxu0
    %v1914 = vadd.f32 %v1785, %v1913
    %1915 = vmatmul.bf16.gmra.mxu0 %v1473
    %v1916 = vpop.f32.mrf.mxu0
    %v1917 = vadd.f32 %v1788, %v1916
    %v1918 = vpop.f32.mrf.mxu0
    %v1919 = vadd.f32 %v1790, %v1918
    %1920 = vmatmul.bf16.gmra.mxu0 %v1476
    %v1921 = vpop.f32.mrf.mxu0
    %v1922 = vadd.f32 %v1793, %v1921
    %v1923 = vpop.f32.mrf.mxu0
    %v1924 = vadd.f32 %v1795, %v1923
    %1925 = vmatmul.bf16.gmra.mxu0 %v1479
    %v1926 = vpop.f32.mrf.mxu0
    %v1927 = vadd.f32 %v1798, %v1926
    %v1928 = vpop.f32.mrf.mxu0
    %v1929 = vadd.f32 %v1800, %v1928
    %1930 = vmatmul.bf16.gmra.mxu0 %v1482
    %v1931 = vpop.f32.mrf.mxu0
    %v1932 = vadd.f32 %v1803, %v1931
    %v1933 = vpop.f32.mrf.mxu0
    %v1934 = vadd.f32 %v1805, %v1933
    %1935 = vmatmul.bf16.gmra.mxu0 %v1485
    %v1936 = vpop.f32.mrf.mxu0
    %v1937 = vadd.f32 %v1808, %v1936
    %v1938 = vpop.f32.mrf.mxu0
    %v1939 = vadd.f32 %v1810, %v1938
    %1940 = vmatmul.bf16.gmra.mxu0 %v1488
    %v1941 = vpop.f32.mrf.mxu0
    %v1942 = vadd.f32 %v1813, %v1941
    %v1943 = vpop.f32.mrf.mxu0
    %v1944 = vadd.f32 %v1815, %v1943
    %1945 = vmatmul.bf16.gmra.mxu0 %v1491
    %v1946 = vpop.f32.mrf.mxu0
    %v1947 = vadd.f32 %v1818, %v1946
    %v1948 = vpop.f32.mrf.mxu0
    %v1949 = vadd.f32 %v1820, %v1948
    %1950 = vdwg.mxu0
    %v1951 = vmax.f32 %v1832, 0.0
    %v1952 = vmax.f32 %v1834, 0.0
    %v1953 = vmax.f32 %v1837, 0.0
    %v1954 = vmax.f32 %v1839, 0.0
    %v1955 = vmax.f32 %v1842, 0.0
    %v1956 = vmax.f32 %v1844, 0.0
    %v1957 = vmax.f32 %v1847, 0.0
    %v1958 = vmax.f32 %v1849, 0.0
    %v1959 = vmax.f32 %v1852, 0.0
    %v1960 = vmax.f32 %v1854, 0.0
    %v1961 = vmax.f32 %v1857, 0.0
    %v1962 = vmax.f32 %v1859, 0.0
    %v1963 = vmax.f32 %v1862, 0.0
    %v1964 = vmax.f32 %v1864, 0.0
    %v1965 = vmax.f32 %v1867, 0.0
    %v1966 = vmax.f32 %v1869, 0.0
    %v1967 = vmax.f32 %v1872, 0.0
    %v1968 = vmax.f32 %v1874, 0.0
    %v1969 = vmax.f32 %v1877, 0.0
    %v1970 = vmax.f32 %v1879, 0.0
    %v1971 = vmax.f32 %v1882, 0.0
    %v1972 = vmax.f32 %v1884, 0.0
    %v1973 = vmax.f32 %v1887, 0.0
    %v1974 = vmax.f32 %v1889, 0.0
    %v1975 = vmax.f32 %v1892, 0.0
    %v1976 = vmax.f32 %v1894, 0.0
    %v1977 = vmax.f32 %v1897, 0.0
    %v1978 = vmax.f32 %v1899, 0.0
    %v1979 = vmax.f32 %v1902, 0.0
    %v1980 = vmax.f32 %v1904, 0.0
    %v1981 = vmax.f32 %v1907, 0.0
    %v1982 = vmax.f32 %v1909, 0.0
    %v1983 = vmax.f32 %v1912, 0.0
    %v1984 = vmax.f32 %v1914, 0.0
    %v1985 = vmax.f32 %v1917, 0.0
    %v1986 = vmax.f32 %v1919, 0.0
    %v1987 = vmax.f32 %v1922, 0.0
    %v1988 = vmax.f32 %v1924, 0.0
    %v1989 = vmax.f32 %v1927, 0.0
    %v1990 = vmax.f32 %v1929, 0.0
    %v1991 = vmax.f32 %v1932, 0.0
    %v1992 = vmax.f32 %v1934, 0.0
    %v1993 = vmax.f32 %v1937, 0.0
    %v1994 = vmax.f32 %v1939, 0.0
    %v1995 = vmax.f32 %v1942, 0.0
    %v1996 = vmax.f32 %v1944, 0.0
    %v1997 = vmax.f32 %v1947, 0.0
    %v1998 = vmax.f32 %v1949, 0.0
    %v1999 = vpack.c.bf16 %v1952, %v1951
    %v2000 = vpack.c.bf16 %v1954, %v1953
    %v2001 = vpack.c.bf16 %v1956, %v1955
    %v2002 = vpack.c.bf16 %v1958, %v1957
    %v2003 = vpack.c.bf16 %v1960, %v1959
    %v2004 = vpack.c.bf16 %v1962, %v1961
    %v2005 = vpack.c.bf16 %v1964, %v1963
    %v2006 = vpack.c.bf16 %v1966, %v1965
    %v2007 = vpack.c.bf16 %v1968, %v1967
    %v2008 = vpack.c.bf16 %v1970, %v1969
    %v2009 = vpack.c.bf16 %v1972, %v1971
    %v2010 = vpack.c.bf16 %v1974, %v1973
    %v2011 = vpack.c.bf16 %v1976, %v1975
    %v2012 = vpack.c.bf16 %v1978, %v1977
    %v2013 = vpack.c.bf16 %v1980, %v1979
    %v2014 = vpack.c.bf16 %v1982, %v1981
    %v2015 = vpack.c.bf16 %v1984, %v1983
    %v2016 = vpack.c.bf16 %v1986, %v1985
    %v2017 = vpack.c.bf16 %v1988, %v1987
    %v2018 = vpack.c.bf16 %v1990, %v1989
    %v2019 = vpack.c.bf16 %v1992, %v1991
    %v2020 = vpack.c.bf16 %v1994, %v1993
    %v2021 = vpack.c.bf16 %v1996, %v1995
    %v2022 = vpack.c.bf16 %v1998, %v1997
    %v2023 = vld [vmem:[%s5] sm:$0xff]
    %v2024 = vld [vmem:[%s5 + $0x8] sm:$0xf]
    %v2025 = vld [vmem:[%s5 + $0xc] sm:$0xff]
    %v2026 = vld [vmem:[%s5 + $0x14] sm:$0xf]
    %v2027 = vld [vmem:[%s5 + $0x18] sm:$0xff]
    %v2028 = vld [vmem:[%s5 + $0x20] sm:$0xf]
    %v2029 = vld [vmem:[%s5 + $0x24] sm:$0xff]
    %v2030 = vld [vmem:[%s5 + $0x2c] sm:$0xf]
    %v2031 = vld [vmem:[%s5 + $0x30] sm:$0xff]
    %v2032 = vld [vmem:[%s5 + $0x38] sm:$0xf]
    %v2033 = vld [vmem:[%s5 + $0x3c] sm:$0xff]
    %v2034 = vld [vmem:[%s5 + $0x44] sm:$0xf]
    %v2035 = vld [vmem:[%s5 + $0x48] sm:$0xff]
    %v2036 = vld [vmem:[%s5 + $0x50] sm:$0xf]
    %v2037 = vld [vmem:[%s5 + $0x54] sm:$0xff]
    %v2038 = vld [vmem:[%s5 + $0x5c] sm:$0xf]
    %v2039 = vld [vmem:[%s5 + $0x60] sm:$0xff]
    %v2040 = vld [vmem:[%s5 + $0x68] sm:$0xf]
    %v2041 = vld [vmem:[%s5 + $0x6c] sm:$0xff]
    %v2042 = vld [vmem:[%s5 + $0x74] sm:$0xf]
    %v2043 = vld [vmem:[%s5 + $0x78] sm:$0xff]
    %v2044 = vld [vmem:[%s5 + $0x80] sm:$0xf]
    %v2045 = vld [vmem:[%s5 + $0x84] sm:$0xff]
    %v2046 = vld [vmem:[%s5 + $0x8c] sm:$0xf]
    %v2047 = vld [vmem:[%s5 + $0x90] sm:$0xff]
    %v2048 = vld [vmem:[%s5 + $0x98] sm:$0xf]
    %v2049 = vld [vmem:[%s5 + $0x9c] sm:$0xff]
    %v2050 = vld [vmem:[%s5 + $0xa4] sm:$0xf]
    %v2051 = vld [vmem:[%s5 + $0xa8] sm:$0xff]
    %v2052 = vld [vmem:[%s5 + $0xb0] sm:$0xf]
    %v2053 = vld [vmem:[%s5 + $0xb4] sm:$0xff]
    %v2054 = vld [vmem:[%s5 + $0xbc] sm:$0xf]
    %v2055 = vld [vmem:[%s5 + $0xc0] sm:$0xff]
    %v2056 = vld [vmem:[%s5 + $0xc8] sm:$0xf]
    %v2057 = vld [vmem:[%s5 + $0xcc] sm:$0xff]
    %v2058 = vld [vmem:[%s5 + $0xd4] sm:$0xf]
    %v2059 = vld [vmem:[%s5 + $0xd8] sm:$0xff]
    %v2060 = vld [vmem:[%s5 + $0xe0] sm:$0xf]
    %v2061 = vld [vmem:[%s5 + $0xe4] sm:$0xff]
    %v2062 = vld [vmem:[%s5 + $0xec] sm:$0xf]
    %v2063 = vld [vmem:[%s5 + $0xf0] sm:$0xff]
    %v2064 = vld [vmem:[%s5 + $0xf8] sm:$0xf]
    %v2065 = vld [vmem:[%s5 + $0xfc] sm:$0xff]
    %v2066 = vld [vmem:[%s5 + $0x104] sm:$0xf]
    %v2067 = vld [vmem:[%s5 + $0x108] sm:$0xff]
    %v2068 = vld [vmem:[%s5 + $0x110] sm:$0xf]
    %v2069 = vld [vmem:[%s5 + $0x114] sm:$0xff]
    %v2070 = vld [vmem:[%s5 + $0x11c] sm:$0xf]
    %v2071 = vld [vmem:[%s5 + $0x120] sm:$0xff]
    %v2072 = vld [vmem:[%s5 + $0x128] sm:$0xf]
    %v2073 = vld [vmem:[%s5 + $0x12c] sm:$0xff]
    %v2074 = vld [vmem:[%s5 + $0x134] sm:$0xf]
    %v2075 = vld [vmem:[%s5 + $0x138] sm:$0xff]
    %v2076 = vld [vmem:[%s5 + $0x140] sm:$0xf]
    %v2077 = vld [vmem:[%s5 + $0x144] sm:$0xff]
    %v2078 = vld [vmem:[%s5 + $0x14c] sm:$0xf]
    %v2079 = vld [vmem:[%s5 + $0x150] sm:$0xff]
    %v2080 = vld [vmem:[%s5 + $0x158] sm:$0xf]
    %v2081 = vld [vmem:[%s5 + $0x15c] sm:$0xff]
    %v2082 = vld [vmem:[%s5 + $0x164] sm:$0xf]
    %v2083 = vld [vmem:[%s5 + $0x168] sm:$0xff]
    %v2084 = vld [vmem:[%s5 + $0x170] sm:$0xf]
    %v2085 = vld [vmem:[%s5 + $0x174] sm:$0xff]
    %v2086 = vld [vmem:[%s5 + $0x17c] sm:$0xf]
    %v2087 = vld [vmem:[%s6] sm:$0xff]
    %v2088 = vld [vmem:[%s6 + $0x8] sm:$0xff]
    %v2089 = vld [vmem:[%s6 + $0x10] sm:$0xff]
    %v2090 = vld [vmem:[%s6 + $0x18] sm:$0xff]
    %v2091 = vld [vmem:[%s6 + $0x20] sm:$0xff]
    %v2092 = vld [vmem:[%s6 + $0x28] sm:$0xff]
    %v2093 = vld [vmem:[%s6 + $0x30] sm:$0xff]
    %v2094 = vld [vmem:[%s6 + $0x38] sm:$0xff]
    %v2095 = vld [vmem:[%s6 + $0x40] sm:$0xff]
    %v2096 = vld [vmem:[%s6 + $0x48] sm:$0xff]
    %v2097 = vld [vmem:[%s6 + $0x50] sm:$0xff]
    %v2098 = vld [vmem:[%s6 + $0x58] sm:$0xff]
    %v2099 = vld [vmem:[%s6 + $0x60] sm:$0xff]
    %v2100 = vld [vmem:[%s6 + $0x68] sm:$0xff]
    %v2101 = vld [vmem:[%s6 + $0x70] sm:$0xff]
    %v2102 = vld [vmem:[%s6 + $0x78] sm:$0xff]
    %v2103 = vld [vmem:[%s6 + $0x80] sm:$0xff]
    %v2104 = vld [vmem:[%s6 + $0x88] sm:$0xff]
    %v2105 = vld [vmem:[%s6 + $0x90] sm:$0xff]
    %v2106 = vld [vmem:[%s6 + $0x98] sm:$0xff]
    %v2107 = vld [vmem:[%s6 + $0xa0] sm:$0xff]
    %v2108 = vld [vmem:[%s6 + $0xa8] sm:$0xff]
    %v2109 = vld [vmem:[%s6 + $0xb0] sm:$0xff]
    %v2110 = vld [vmem:[%s6 + $0xb8] sm:$0xff]
    %v2111 = vld [vmem:[%s6 + $0xc0] sm:$0xff]
    %v2112 = vld [vmem:[%s6 + $0xc8] sm:$0xff]
    %v2113 = vld [vmem:[%s6 + $0xd0] sm:$0xff]
    %v2114 = vld [vmem:[%s6 + $0xd8] sm:$0xff]
    %v2115 = vld [vmem:[%s6 + $0xe0] sm:$0xff]
    %v2116 = vld [vmem:[%s6 + $0xe8] sm:$0xff]
    %v2117 = vld [vmem:[%s6 + $0xf0] sm:$0xff]
    %v2118 = vld [vmem:[%s6 + $0xf8] sm:$0xff]
    %2120 = vset.pattern.permute.xlu0 0
    %2121 = vperm.xlu0 %2120, %v2087
    %v2122 = vpop.permute.xlu0 %2121
    %2125 = vset.pattern.permute.xlu0 0
    %2126 = vperm.xlu0 %2125, %v2088
    %v2127 = vpop.permute.xlu0 %2126
    %2130 = vset.pattern.permute.xlu0 0
    %2131 = vperm.xlu0 %2130, %v2089
    %v2132 = vpop.permute.xlu0 %2131
    %2135 = vset.pattern.permute.xlu0 0
    %2136 = vperm.xlu0 %2135, %v2090
    %v2137 = vpop.permute.xlu0 %2136
    %2140 = vset.pattern.permute.xlu0 0
    %2141 = vperm.xlu0 %2140, %v2091
    %v2142 = vpop.permute.xlu0 %2141
    %2145 = vset.pattern.permute.xlu0 0
    %2146 = vperm.xlu0 %2145, %v2092
    %v2147 = vpop.permute.xlu0 %2146
    %2150 = vset.pattern.permute.xlu0 0
    %2151 = vperm.xlu0 %2150, %v2093
    %v2152 = vpop.permute.xlu0 %2151
    %2155 = vset.pattern.permute.xlu0 0
    %2156 = vperm.xlu0 %2155, %v2094
    %v2157 = vpop.permute.xlu0 %2156
    %2160 = vset.pattern.permute.xlu0 0
    %2161 = vperm.xlu0 %2160, %v2095
    %v2162 = vpop.permute.xlu0 %2161
    %2165 = vset.pattern.permute.xlu0 0
    %2166 = vperm.xlu0 %2165, %v2096
    %v2167 = vpop.permute.xlu0 %2166
    %2170 = vset.pattern.permute.xlu0 0
    %2171 = vperm.xlu0 %2170, %v2097
    %v2172 = vpop.permute.xlu0 %2171
    %2175 = vset.pattern.permute.xlu0 0
    %2176 = vperm.xlu0 %2175, %v2098
    %v2177 = vpop.permute.xlu0 %2176
    %2180 = vset.pattern.permute.xlu0 0
    %2181 = vperm.xlu0 %2180, %v2099
    %v2182 = vpop.permute.xlu0 %2181
    %2185 = vset.pattern.permute.xlu0 0
    %2186 = vperm.xlu0 %2185, %v2100
    %v2187 = vpop.permute.xlu0 %2186
    %2190 = vset.pattern.permute.xlu0 0
    %2191 = vperm.xlu0 %2190, %v2101
    %v2192 = vpop.permute.xlu0 %2191
    %2195 = vset.pattern.permute.xlu0 0
    %2196 = vperm.xlu0 %2195, %v2102
    %v2197 = vpop.permute.xlu0 %2196
    %2200 = vset.pattern.permute.xlu0 0
    %2201 = vperm.xlu0 %2200, %v2103
    %v2202 = vpop.permute.xlu0 %2201
    %2205 = vset.pattern.permute.xlu0 0
    %2206 = vperm.xlu0 %2205, %v2104
    %v2207 = vpop.permute.xlu0 %2206
    %2210 = vset.pattern.permute.xlu0 0
    %2211 = vperm.xlu0 %2210, %v2105
    %v2212 = vpop.permute.xlu0 %2211
    %2215 = vset.pattern.permute.xlu0 0
    %2216 = vperm.xlu0 %2215, %v2106
    %v2217 = vpop.permute.xlu0 %2216
    %2220 = vset.pattern.permute.xlu0 0
    %2221 = vperm.xlu0 %2220, %v2107
    %v2222 = vpop.permute.xlu0 %2221
    %2225 = vset.pattern.permute.xlu0 0
    %2226 = vperm.xlu0 %2225, %v2108
    %v2227 = vpop.permute.xlu0 %2226
    %2230 = vset.pattern.permute.xlu0 0
    %2231 = vperm.xlu0 %2230, %v2109
    %v2232 = vpop.permute.xlu0 %2231
    %2235 = vset.pattern.permute.xlu0 0
    %2236 = vperm.xlu0 %2235, %v2110
    %v2237 = vpop.permute.xlu0 %2236
    %2240 = vset.pattern.permute.xlu0 0
    %2241 = vperm.xlu0 %2240, %v2111
    %v2242 = vpop.permute.xlu0 %2241
    %2245 = vset.pattern.permute.xlu0 0
    %2246 = vperm.xlu0 %2245, %v2112
    %v2247 = vpop.permute.xlu0 %2246
    %2250 = vset.pattern.permute.xlu0 0
    %2251 = vperm.xlu0 %2250, %v2113
    %v2252 = vpop.permute.xlu0 %2251
    %2255 = vset.pattern.permute.xlu0 0
    %2256 = vperm.xlu0 %2255, %v2114
    %v2257 = vpop.permute.xlu0 %2256
    %2260 = vset.pattern.permute.xlu0 0
    %2261 = vperm.xlu0 %2260, %v2115
    %v2262 = vpop.permute.xlu0 %2261
    %2265 = vset.pattern.permute.xlu0 0
    %2266 = vperm.xlu0 %2265, %v2116
    %v2267 = vpop.permute.xlu0 %2266
    %2270 = vset.pattern.permute.xlu0 0
    %2271 = vperm.xlu0 %2270, %v2117
    %v2272 = vpop.permute.xlu0 %2271
    %2275 = vset.pattern.permute.xlu0 0
    %2276 = vperm.xlu0 %2275, %v2118
    %v2277 = vpop.permute.xlu0 %2276
    %v2343 = vunpack.c.l.b16 %v2023
    %v2344 = vunpack.c.h.b16 %v2023
    %v2345 = vunpack.c.l.b16 %v2024
    %v2346 = vunpack.c.l.b16 %v2025
    %v2347 = vunpack.c.h.b16 %v2025
    %v2348 = vunpack.c.l.b16 %v2026
    %v2349 = vunpack.c.l.b16 %v2027
    %v2350 = vunpack.c.h.b16 %v2027
    %v2351 = vunpack.c.l.b16 %v2028
    %v2352 = vunpack.c.l.b16 %v2029
    %v2353 = vunpack.c.h.b16 %v2029
    %v2354 = vunpack.c.l.b16 %v2030
    %v2355 = vunpack.c.l.b16 %v2031
    %v2356 = vunpack.c.h.b16 %v2031
    %v2357 = vunpack.c.l.b16 %v2032
    %v2358 = vunpack.c.l.b16 %v2033
    %v2359 = vunpack.c.h.b16 %v2033
    %v2360 = vunpack.c.l.b16 %v2034
    %v2361 = vunpack.c.l.b16 %v2035
    %v2362 = vunpack.c.h.b16 %v2035
    %v2363 = vunpack.c.l.b16 %v2036
    %v2364 = vunpack.c.l.b16 %v2037
    %v2365 = vunpack.c.h.b16 %v2037
    %v2366 = vunpack.c.l.b16 %v2038
    %v2367 = vunpack.c.l.b16 %v2039
    %v2368 = vunpack.c.h.b16 %v2039
    %v2369 = vunpack.c.l.b16 %v2040
    %v2370 = vunpack.c.l.b16 %v2041
    %v2371 = vunpack.c.h.b16 %v2041
    %v2372 = vunpack.c.l.b16 %v2042
    %v2373 = vunpack.c.l.b16 %v2043
    %v2374 = vunpack.c.h.b16 %v2043
    %v2375 = vunpack.c.l.b16 %v2044
    %v2376 = vunpack.c.l.b16 %v2045
    %v2377 = vunpack.c.h.b16 %v2045
    %v2378 = vunpack.c.l.b16 %v2046
    %v2379 = vunpack.c.l.b16 %v2047
    %v2380 = vunpack.c.h.b16 %v2047
    %v2381 = vunpack.c.l.b16 %v2048
    %v2382 = vunpack.c.l.b16 %v2049
    %v2383 = vunpack.c.h.b16 %v2049
    %v2384 = vunpack.c.l.b16 %v2050
    %v2385 = vunpack.c.l.b16 %v2051
    %v2386 = vunpack.c.h.b16 %v2051
    %v2387 = vunpack.c.l.b16 %v2052
    %v2388 = vunpack.c.l.b16 %v2053
    %v2389 = vunpack.c.h.b16 %v2053
    %v2390 = vunpack.c.l.b16 %v2054
    %v2391 = vunpack.c.l.b16 %v2055
    %v2392 = vunpack.c.h.b16 %v2055
    %v2393 = vunpack.c.l.b16 %v2056
    %v2394 = vunpack.c.l.b16 %v2057
    %v2395 = vunpack.c.h.b16 %v2057
    %v2396 = vunpack.c.l.b16 %v2058
    %v2397 = vunpack.c.l.b16 %v2059
    %v2398 = vunpack.c.h.b16 %v2059
    %v2399 = vunpack.c.l.b16 %v2060
    %v2400 = vunpack.c.l.b16 %v2061
    %v2401 = vunpack.c.h.b16 %v2061
    %v2402 = vunpack.c.l.b16 %v2062
    %v2403 = vunpack.c.l.b16 %v2063
    %v2404 = vunpack.c.h.b16 %v2063
    %v2405 = vunpack.c.l.b16 %v2064
    %v2406 = vunpack.c.l.b16 %v2065
    %v2407 = vunpack.c.h.b16 %v2065
    %v2408 = vunpack.c.l.b16 %v2066
    %v2409 = vunpack.c.l.b16 %v2067
    %v2410 = vunpack.c.h.b16 %v2067
    %v2411 = vunpack.c.l.b16 %v2068
    %v2412 = vunpack.c.l.b16 %v2069
    %v2413 = vunpack.c.h.b16 %v2069
    %v2414 = vunpack.c.l.b16 %v2070
    %v2415 = vunpack.c.l.b16 %v2071
    %v2416 = vunpack.c.h.b16 %v2071
    %v2417 = vunpack.c.l.b16 %v2072
    %v2418 = vunpack.c.l.b16 %v2073
    %v2419 = vunpack.c.h.b16 %v2073
    %v2420 = vunpack.c.l.b16 %v2074
    %v2421 = vunpack.c.l.b16 %v2075
    %v2422 = vunpack.c.h.b16 %v2075
    %v2423 = vunpack.c.l.b16 %v2076
    %v2424 = vunpack.c.l.b16 %v2077
    %v2425 = vunpack.c.h.b16 %v2077
    %v2426 = vunpack.c.l.b16 %v2078
    %v2427 = vunpack.c.l.b16 %v2079
    %v2428 = vunpack.c.h.b16 %v2079
    %v2429 = vunpack.c.l.b16 %v2080
    %v2430 = vunpack.c.l.b16 %v2081
    %v2431 = vunpack.c.h.b16 %v2081
    %v2432 = vunpack.c.l.b16 %v2082
    %v2433 = vunpack.c.l.b16 %v2083
    %v2434 = vunpack.c.h.b16 %v2083
    %v2435 = vunpack.c.l.b16 %v2084
    %v2436 = vunpack.c.l.b16 %v2085
    %v2437 = vunpack.c.h.b16 %v2085
    %v2438 = vunpack.c.l.b16 %v2086
    %v2439 = vpack.c.b16 %v2346, %v2343
    %v2440 = vpack.c.b16 %v2347, %v2344
    %v2441 = vpack.c.b16 %v2348, %v2345
    %v2442 = vpack.c.b16 %v2352, %v2349
    %v2443 = vpack.c.b16 %v2353, %v2350
    %v2444 = vpack.c.b16 %v2354, %v2351
    %v2445 = vpack.c.b16 %v2358, %v2355
    %v2446 = vpack.c.b16 %v2359, %v2356
    %v2447 = vpack.c.b16 %v2360, %v2357
    %v2448 = vpack.c.b16 %v2364, %v2361
    %v2449 = vpack.c.b16 %v2365, %v2362
    %v2450 = vpack.c.b16 %v2366, %v2363
    %v2451 = vpack.c.b16 %v2370, %v2367
    %v2452 = vpack.c.b16 %v2371, %v2368
    %v2453 = vpack.c.b16 %v2372, %v2369
    %v2454 = vpack.c.b16 %v2376, %v2373
    %v2455 = vpack.c.b16 %v2377, %v2374
    %v2456 = vpack.c.b16 %v2378, %v2375
    %v2457 = vpack.c.b16 %v2382, %v2379
    %v2458 = vpack.c.b16 %v2383, %v2380
    %v2459 = vpack.c.b16 %v2384, %v2381
    %v2460 = vpack.c.b16 %v2388, %v2385
    %v2461 = vpack.c.b16 %v2389, %v2386
    %v2462 = vpack.c.b16 %v2390, %v2387
    %v2463 = vpack.c.b16 %v2394, %v2391
    %v2464 = vpack.c.b16 %v2395, %v2392
    %v2465 = vpack.c.b16 %v2396, %v2393
    %v2466 = vpack.c.b16 %v2400, %v2397
    %v2467 = vpack.c.b16 %v2401, %v2398
    %v2468 = vpack.c.b16 %v2402, %v2399
    %v2469 = vpack.c.b16 %v2406, %v2403
    %v2470 = vpack.c.b16 %v2407, %v2404
    %v2471 = vpack.c.b16 %v2408, %v2405
    %v2472 = vpack.c.b16 %v2412, %v2409
    %v2473 = vpack.c.b16 %v2413, %v2410
    %v2474 = vpack.c.b16 %v2414, %v2411
    %v2475 = vpack.c.b16 %v2418, %v2415
    %v2476 = vpack.c.b16 %v2419, %v2416
    %v2477 = vpack.c.b16 %v2420, %v2417
    %v2478 = vpack.c.b16 %v2424, %v2421
    %v2479 = vpack.c.b16 %v2425, %v2422
    %v2480 = vpack.c.b16 %v2426, %v2423
    %v2481 = vpack.c.b16 %v2430, %v2427
    %v2482 = vpack.c.b16 %v2431, %v2428
    %v2483 = vpack.c.b16 %v2432, %v2429
    %v2484 = vpack.c.b16 %v2436, %v2433
    %v2485 = vpack.c.b16 %v2437, %v2434
    %v2486 = vpack.c.b16 %v2438, %v2435
    %2535 = vmatpush.bf16.msra.mxu0 %v2006
    %2536 = vmatpush.bf16.msra.mxu0 %v2005
    %2537 = vmatpush.bf16.msra.mxu0 %v2004
    %2538 = vmatpush.bf16.msra.mxu0 %v2003
    %2539 = vmatpush.bf16.msra.mxu0 %v2002
    %2540 = vmatpush.bf16.msra.mxu0 %v2001
    %2541 = vmatpush.bf16.msra.mxu0 %v2000
    %2542 = vmatpush.bf16.msra.mxu0 %v1999
    %2543 = vmatmul.bf16.gmra.mxu0 %v2439
    %v2544 = vpop.f32.mrf.mxu0
    %v2545 = vadd.f32 %v2122, %v2544
    %v2546 = vpop.f32.mrf.mxu0
    %v2547 = vadd.f32 %v2127, %v2546
    %2548 = vmatmul.bf16.gmra.mxu0 %v2442
    %v2549 = vpop.f32.mrf.mxu0
    %v2550 = vadd.f32 %v2132, %v2549
    %v2551 = vpop.f32.mrf.mxu0
    %v2552 = vadd.f32 %v2137, %v2551
    %2553 = vmatmul.bf16.gmra.mxu0 %v2445
    %v2554 = vpop.f32.mrf.mxu0
    %v2555 = vadd.f32 %v2142, %v2554
    %v2556 = vpop.f32.mrf.mxu0
    %v2557 = vadd.f32 %v2147, %v2556
    %2558 = vmatmul.bf16.gmra.mxu0 %v2448
    %v2559 = vpop.f32.mrf.mxu0
    %v2560 = vadd.f32 %v2152, %v2559
    %v2561 = vpop.f32.mrf.mxu0
    %v2562 = vadd.f32 %v2157, %v2561
    %2563 = vmatmul.bf16.gmra.mxu0 %v2451
    %v2564 = vpop.f32.mrf.mxu0
    %v2565 = vadd.f32 %v2162, %v2564
    %v2566 = vpop.f32.mrf.mxu0
    %v2567 = vadd.f32 %v2167, %v2566
    %2568 = vmatmul.bf16.gmra.mxu0 %v2454
    %v2569 = vpop.f32.mrf.mxu0
    %v2570 = vadd.f32 %v2172, %v2569
    %v2571 = vpop.f32.mrf.mxu0
    %v2572 = vadd.f32 %v2177, %v2571
    %2573 = vmatmul.bf16.gmra.mxu0 %v2457
    %v2574 = vpop.f32.mrf.mxu0
    %v2575 = vadd.f32 %v2182, %v2574
    %v2576 = vpop.f32.mrf.mxu0
    %v2577 = vadd.f32 %v2187, %v2576
    %2578 = vmatmul.bf16.gmra.mxu0 %v2460
    %v2579 = vpop.f32.mrf.mxu0
    %v2580 = vadd.f32 %v2192, %v2579
    %v2581 = vpop.f32.mrf.mxu0
    %v2582 = vadd.f32 %v2197, %v2581
    %2583 = vmatmul.bf16.gmra.mxu0 %v2463
    %v2584 = vpop.f32.mrf.mxu0
    %v2585 = vadd.f32 %v2202, %v2584
    %v2586 = vpop.f32.mrf.mxu0
    %v2587 = vadd.f32 %v2207, %v2586
    %2588 = vmatmul.bf16.gmra.mxu0 %v2466
    %v2589 = vpop.f32.mrf.mxu0
    %v2590 = vadd.f32 %v2212, %v2589
    %v2591 = vpop.f32.mrf.mxu0
    %v2592 = vadd.f32 %v2217, %v2591
    %2593 = vmatmul.bf16.gmra.mxu0 %v2469
    %v2594 = vpop.f32.mrf.mxu0
    %v2595 = vadd.f32 %v2222, %v2594
    %v2596 = vpop.f32.mrf.mxu0
    %v2597 = vadd.f32 %v2227, %v2596
    %2598 = vmatmul.bf16.gmra.mxu0 %v2472
    %v2599 = vpop.f32.mrf.mxu0
    %v2600 = vadd.f32 %v2232, %v2599
    %v2601 = vpop.f32.mrf.mxu0
    %v2602 = vadd.f32 %v2237, %v2601
    %2603 = vmatmul.bf16.gmra.mxu0 %v2475
    %v2604 = vpop.f32.mrf.mxu0
    %v2605 = vadd.f32 %v2242, %v2604
    %v2606 = vpop.f32.mrf.mxu0
    %v2607 = vadd.f32 %v2247, %v2606
    %2608 = vmatmul.bf16.gmra.mxu0 %v2478
    %v2609 = vpop.f32.mrf.mxu0
    %v2610 = vadd.f32 %v2252, %v2609
    %v2611 = vpop.f32.mrf.mxu0
    %v2612 = vadd.f32 %v2257, %v2611
    %2613 = vmatmul.bf16.gmra.mxu0 %v2481
    %v2614 = vpop.f32.mrf.mxu0
    %v2615 = vadd.f32 %v2262, %v2614
    %v2616 = vpop.f32.mrf.mxu0
    %v2617 = vadd.f32 %v2267, %v2616
    %2618 = vmatmul.bf16.gmra.mxu0 %v2484
    %v2619 = vpop.f32.mrf.mxu0
    %v2620 = vadd.f32 %v2272, %v2619
    %v2621 = vpop.f32.mrf.mxu0
    %v2622 = vadd.f32 %v2277, %v2621
    %2623 = vdwg.mxu0
    %2624 = vmatpush.bf16.msra.mxu0 %v2014
    %2625 = vmatpush.bf16.msra.mxu0 %v2013
    %2626 = vmatpush.bf16.msra.mxu0 %v2012
    %2627 = vmatpush.bf16.msra.mxu0 %v2011
    %2628 = vmatpush.bf16.msra.mxu0 %v2010
    %2629 = vmatpush.bf16.msra.mxu0 %v2009
    %2630 = vmatpush.bf16.msra.mxu0 %v2008
    %2631 = vmatpush.bf16.msra.mxu0 %v2007
    %2632 = vmatmul.bf16.gmra.mxu0 %v2440
    %v2633 = vpop.f32.mrf.mxu0
    %v2634 = vadd.f32 %v2545, %v2633
    %v2635 = vpop.f32.mrf.mxu0
    %v2636 = vadd.f32 %v2547, %v2635
    %2637 = vmatmul.bf16.gmra.mxu0 %v2443
    %v2638 = vpop.f32.mrf.mxu0
    %v2639 = vadd.f32 %v2550, %v2638
    %v2640 = vpop.f32.mrf.mxu0
    %v2641 = vadd.f32 %v2552, %v2640
    %2642 = vmatmul.bf16.gmra.mxu0 %v2446
    %v2643 = vpop.f32.mrf.mxu0
    %v2644 = vadd.f32 %v2555, %v2643
    %v2645 = vpop.f32.mrf.mxu0
    %v2646 = vadd.f32 %v2557, %v2645
    %2647 = vmatmul.bf16.gmra.mxu0 %v2449
    %v2648 = vpop.f32.mrf.mxu0
    %v2649 = vadd.f32 %v2560, %v2648
    %v2650 = vpop.f32.mrf.mxu0
    %v2651 = vadd.f32 %v2562, %v2650
    %2652 = vmatmul.bf16.gmra.mxu0 %v2452
    %v2653 = vpop.f32.mrf.mxu0
    %v2654 = vadd.f32 %v2565, %v2653
    %v2655 = vpop.f32.mrf.mxu0
    %v2656 = vadd.f32 %v2567, %v2655
    %2657 = vmatmul.bf16.gmra.mxu0 %v2455
    %v2658 = vpop.f32.mrf.mxu0
    %v2659 = vadd.f32 %v2570, %v2658
    %v2660 = vpop.f32.mrf.mxu0
    %v2661 = vadd.f32 %v2572, %v2660
    %2662 = vmatmul.bf16.gmra.mxu0 %v2458
    %v2663 = vpop.f32.mrf.mxu0
    %v2664 = vadd.f32 %v2575, %v2663
    %v2665 = vpop.f32.mrf.mxu0
    %v2666 = vadd.f32 %v2577, %v2665
    %2667 = vmatmul.bf16.gmra.mxu0 %v2461
    %v2668 = vpop.f32.mrf.mxu0
    %v2669 = vadd.f32 %v2580, %v2668
    %v2670 = vpop.f32.mrf.mxu0
    %v2671 = vadd.f32 %v2582, %v2670
    %2672 = vmatmul.bf16.gmra.mxu0 %v2464
    %v2673 = vpop.f32.mrf.mxu0
    %v2674 = vadd.f32 %v2585, %v2673
    %v2675 = vpop.f32.mrf.mxu0
    %v2676 = vadd.f32 %v2587, %v2675
    %2677 = vmatmul.bf16.gmra.mxu0 %v2467
    %v2678 = vpop.f32.mrf.mxu0
    %v2679 = vadd.f32 %v2590, %v2678
    %v2680 = vpop.f32.mrf.mxu0
    %v2681 = vadd.f32 %v2592, %v2680
    %2682 = vmatmul.bf16.gmra.mxu0 %v2470
    %v2683 = vpop.f32.mrf.mxu0
    %v2684 = vadd.f32 %v2595, %v2683
    %v2685 = vpop.f32.mrf.mxu0
    %v2686 = vadd.f32 %v2597, %v2685
    %2687 = vmatmul.bf16.gmra.mxu0 %v2473
    %v2688 = vpop.f32.mrf.mxu0
    %v2689 = vadd.f32 %v2600, %v2688
    %v2690 = vpop.f32.mrf.mxu0
    %v2691 = vadd.f32 %v2602, %v2690
    %2692 = vmatmul.bf16.gmra.mxu0 %v2476
    %v2693 = vpop.f32.mrf.mxu0
    %v2694 = vadd.f32 %v2605, %v2693
    %v2695 = vpop.f32.mrf.mxu0
    %v2696 = vadd.f32 %v2607, %v2695
    %2697 = vmatmul.bf16.gmra.mxu0 %v2479
    %v2698 = vpop.f32.mrf.mxu0
    %v2699 = vadd.f32 %v2610, %v2698
    %v2700 = vpop.f32.mrf.mxu0
    %v2701 = vadd.f32 %v2612, %v2700
    %2702 = vmatmul.bf16.gmra.mxu0 %v2482
    %v2703 = vpop.f32.mrf.mxu0
    %v2704 = vadd.f32 %v2615, %v2703
    %v2705 = vpop.f32.mrf.mxu0
    %v2706 = vadd.f32 %v2617, %v2705
    %2707 = vmatmul.bf16.gmra.mxu0 %v2485
    %v2708 = vpop.f32.mrf.mxu0
    %v2709 = vadd.f32 %v2620, %v2708
    %v2710 = vpop.f32.mrf.mxu0
    %v2711 = vadd.f32 %v2622, %v2710
    %2712 = vdwg.mxu0
    %2713 = vmatpush.bf16.msra.mxu0 %v2022
    %2714 = vmatpush.bf16.msra.mxu0 %v2021
    %2715 = vmatpush.bf16.msra.mxu0 %v2020
    %2716 = vmatpush.bf16.msra.mxu0 %v2019
    %2717 = vmatpush.bf16.msra.mxu0 %v2018
    %2718 = vmatpush.bf16.msra.mxu0 %v2017
    %2719 = vmatpush.bf16.msra.mxu0 %v2016
    %2720 = vmatpush.bf16.msra.mxu0 %v2015
    %2721 = vmatmul.bf16.gmra.mxu0 %v2441
    %v2722 = vpop.f32.mrf.mxu0
    %v2723 = vadd.f32 %v2634, %v2722
    %v2724 = vpop.f32.mrf.mxu0
    %v2725 = vadd.f32 %v2636, %v2724
    %2726 = vmatmul.bf16.gmra.mxu0 %v2444
    %v2727 = vpop.f32.mrf.mxu0
    %v2728 = vadd.f32 %v2639, %v2727
    %v2729 = vpop.f32.mrf.mxu0
    %v2730 = vadd.f32 %v2641, %v2729
    %2731 = vmatmul.bf16.gmra.mxu0 %v2447
    %v2732 = vpop.f32.mrf.mxu0
    %v2733 = vadd.f32 %v2644, %v2732
    %v2734 = vpop.f32.mrf.mxu0
    %v2735 = vadd.f32 %v2646, %v2734
    %2736 = vmatmul.bf16.gmra.mxu0 %v2450
    %v2737 = vpop.f32.mrf.mxu0
    %v2738 = vadd.f32 %v2649, %v2737
    %v2739 = vpop.f32.mrf.mxu0
    %v2740 = vadd.f32 %v2651, %v2739
    %2741 = vmatmul.bf16.gmra.mxu0 %v2453
    %v2742 = vpop.f32.mrf.mxu0
    %v2743 = vadd.f32 %v2654, %v2742
    %v2744 = vpop.f32.mrf.mxu0
    %v2745 = vadd.f32 %v2656, %v2744
    %2746 = vmatmul.bf16.gmra.mxu0 %v2456
    %v2747 = vpop.f32.mrf.mxu0
    %v2748 = vadd.f32 %v2659, %v2747
    %v2749 = vpop.f32.mrf.mxu0
    %v2750 = vadd.f32 %v2661, %v2749
    %2751 = vmatmul.bf16.gmra.mxu0 %v2459
    %v2752 = vpop.f32.mrf.mxu0
    %v2753 = vadd.f32 %v2664, %v2752
    %v2754 = vpop.f32.mrf.mxu0
    %v2755 = vadd.f32 %v2666, %v2754
    %2756 = vmatmul.bf16.gmra.mxu0 %v2462
    %v2757 = vpop.f32.mrf.mxu0
    %v2758 = vadd.f32 %v2669, %v2757
    %v2759 = vpop.f32.mrf.mxu0
    %v2760 = vadd.f32 %v2671, %v2759
    %2761 = vmatmul.bf16.gmra.mxu0 %v2465
    %v2762 = vpop.f32.mrf.mxu0
    %v2763 = vadd.f32 %v2674, %v2762
    %v2764 = vpop.f32.mrf.mxu0
    %v2765 = vadd.f32 %v2676, %v2764
    %2766 = vmatmul.bf16.gmra.mxu0 %v2468
    %v2767 = vpop.f32.mrf.mxu0
    %v2768 = vadd.f32 %v2679, %v2767
    %v2769 = vpop.f32.mrf.mxu0
    %v2770 = vadd.f32 %v2681, %v2769
    %2771 = vmatmul.bf16.gmra.mxu0 %v2471
    %v2772 = vpop.f32.mrf.mxu0
    %v2773 = vadd.f32 %v2684, %v2772
    %v2774 = vpop.f32.mrf.mxu0
    %v2775 = vadd.f32 %v2686, %v2774
    %2776 = vmatmul.bf16.gmra.mxu0 %v2474
    %v2777 = vpop.f32.mrf.mxu0
    %v2778 = vadd.f32 %v2689, %v2777
    %v2779 = vpop.f32.mrf.mxu0
    %v2780 = vadd.f32 %v2691, %v2779
    %2781 = vmatmul.bf16.gmra.mxu0 %v2477
    %v2782 = vpop.f32.mrf.mxu0
    %v2783 = vadd.f32 %v2694, %v2782
    %v2784 = vpop.f32.mrf.mxu0
    %v2785 = vadd.f32 %v2696, %v2784
    %2786 = vmatmul.bf16.gmra.mxu0 %v2480
    %v2787 = vpop.f32.mrf.mxu0
    %v2788 = vadd.f32 %v2699, %v2787
    %v2789 = vpop.f32.mrf.mxu0
    %v2790 = vadd.f32 %v2701, %v2789
    %2791 = vmatmul.bf16.gmra.mxu0 %v2483
    %v2792 = vpop.f32.mrf.mxu0
    %v2793 = vadd.f32 %v2704, %v2792
    %v2794 = vpop.f32.mrf.mxu0
    %v2795 = vadd.f32 %v2706, %v2794
    %2796 = vmatmul.bf16.gmra.mxu0 %v2486
    %v2797 = vpop.f32.mrf.mxu0
    %v2798 = vadd.f32 %v2709, %v2797
    %v2799 = vpop.f32.mrf.mxu0
    %v2800 = vadd.f32 %v2711, %v2799
    %2801 = vdwg.mxu0
    %v2802 = vmax.f32 %v2723, 0.0
    %v2803 = vmax.f32 %v2725, 0.0
    %v2804 = vmax.f32 %v2728, 0.0
    %v2805 = vmax.f32 %v2730, 0.0
    %v2806 = vmax.f32 %v2733, 0.0
    %v2807 = vmax.f32 %v2735, 0.0
    %v2808 = vmax.f32 %v2738, 0.0
    %v2809 = vmax.f32 %v2740, 0.0
    %v2810 = vmax.f32 %v2743, 0.0
    %v2811 = vmax.f32 %v2745, 0.0
    %v2812 = vmax.f32 %v2748, 0.0
    %v2813 = vmax.f32 %v2750, 0.0
    %v2814 = vmax.f32 %v2753, 0.0
    %v2815 = vmax.f32 %v2755, 0.0
    %v2816 = vmax.f32 %v2758, 0.0
    %v2817 = vmax.f32 %v2760, 0.0
    %v2818 = vmax.f32 %v2763, 0.0
    %v2819 = vmax.f32 %v2765, 0.0
    %v2820 = vmax.f32 %v2768, 0.0
    %v2821 = vmax.f32 %v2770, 0.0
    %v2822 = vmax.f32 %v2773, 0.0
    %v2823 = vmax.f32 %v2775, 0.0
    %v2824 = vmax.f32 %v2778, 0.0
    %v2825 = vmax.f32 %v2780, 0.0
    %v2826 = vmax.f32 %v2783, 0.0
    %v2827 = vmax.f32 %v2785, 0.0
    %v2828 = vmax.f32 %v2788, 0.0
    %v2829 = vmax.f32 %v2790, 0.0
    %v2830 = vmax.f32 %v2793, 0.0
    %v2831 = vmax.f32 %v2795, 0.0
    %v2832 = vmax.f32 %v2798, 0.0
    %v2833 = vmax.f32 %v2800, 0.0
    %v2834 = vpack.c.bf16 %v2803, %v2802
    %v2835 = vpack.c.bf16 %v2805, %v2804
    %v2836 = vpack.c.bf16 %v2807, %v2806
    %v2837 = vpack.c.bf16 %v2809, %v2808
    %v2838 = vpack.c.bf16 %v2811, %v2810
    %v2839 = vpack.c.bf16 %v2813, %v2812
    %v2840 = vpack.c.bf16 %v2815, %v2814
    %v2841 = vpack.c.bf16 %v2817, %v2816
    %v2842 = vpack.c.bf16 %v2819, %v2818
    %v2843 = vpack.c.bf16 %v2821, %v2820
    %v2844 = vpack.c.bf16 %v2823, %v2822
    %v2845 = vpack.c.bf16 %v2825, %v2824
    %v2846 = vpack.c.bf16 %v2827, %v2826
    %v2847 = vpack.c.bf16 %v2829, %v2828
    %v2848 = vpack.c.bf16 %v2831, %v2830
    %v2849 = vpack.c.bf16 %v2833, %v2832
    %v2850 = vld [vmem:[%s7] sm:$0xff]
    %v2852 = vunpack.c.l.b16 %v2850
    %v2853 = vunpack.c.h.b16 %v2850
    %v2854 = vpack.c.b16 %v2852, %v2852
    %v2855 = vpack.c.b16 %v2853, %v2853
    %2858 = vmatpush.bf16.msra.mxu0 %v2841
    %2859 = vmatpush.bf16.msra.mxu0 %v2840
    %2860 = vmatpush.bf16.msra.mxu0 %v2839
    %2861 = vmatpush.bf16.msra.mxu0 %v2838
    %2862 = vmatpush.bf16.msra.mxu0 %v2837
    %2863 = vmatpush.bf16.msra.mxu0 %v2836
    %2864 = vmatpush.bf16.msra.mxu0 %v2835
    %2865 = vmatpush.bf16.msra.mxu0 %v2834
    %2866 = vmatmul.bf16.gmra.mxu0 %v2854
    %v2867 = vpop.f32.mrf.mxu0
    %v2868 = vadd.f32 0.0, %v2867
    %v2869 = vpop.f32.mrf.mxu0
    %2870 = vdwg.mxu0
    %2871 = vmatpush.bf16.msra.mxu0 %v2849
    %2872 = vmatpush.bf16.msra.mxu0 %v2848
    %2873 = vmatpush.bf16.msra.mxu0 %v2847
    %2874 = vmatpush.bf16.msra.mxu0 %v2846
    %2875 = vmatpush.bf16.msra.mxu0 %v2845
    %2876 = vmatpush.bf16.msra.mxu0 %v2844
    %2877 = vmatpush.bf16.msra.mxu0 %v2843
    %2878 = vmatpush.bf16.msra.mxu0 %v2842
    %2879 = vmatmul.bf16.gmra.mxu0 %v2855
    %v2880 = vpop.f32.mrf.mxu0
    %v2881 = vadd.f32 %v2868, %v2880
    %v2882 = vpop.f32.mrf.mxu0
    %2883 = vdwg.mxu0
    %v2884 = vld [vmem:[#allocation2] sm:$0x1]
    %2886 = vset.pattern.permute.xlu0 0
    %2887 = vperm.xlu0 %2886, %v2884
    %v2888 = vpop.permute.xlu0 %2887
    %v2890 = vperm.slane %v2888, 0
    %v2891 = vadd.f32 %v2881, %v2890
    %v2892 = vxor.u32 %v2891, 2147483648
    %v2893 = vmul.f32 %v2892, 1.442695
    %v2894 = vpow.pop %v2893
    %v2895 = vadd.f32 %v2894, 1.0
    %v2896 = vrcp.pop %v2895
    %v2897 = vmul.f32 %v2895, %v2896
    %v2898 = vsub.f32 1.0, %v2897
    %v2899 = vmul.f32 %v2896, %v2898
    %v2900 = vadd.f32 %v2896, %v2899
    %vm2901 = vweird.f32 %v2895
    %vm2902 = vweird.f32 %v2896
    %vm2903 = vmor %vm2901, %vm2902
    %v2904 = vsel %vm2903, %v2896, %v2900
    %v2905 = vand.u32 2147483647, %v2895
    %vm2906 = vcmp.eq.f32.partialorder %v2905, 8.507059e+37
    %v2907 = vand.u32 %v2895, 2147483648
    %v2908 = vor.u32 1.1754944e-38, %v2907
    %v2909 = vsel %vm2906, %v2908, %v2904
    %v2910 = vmul.f32 1.0, %v2909
    %2911 = vst [vmem:[#allocation6] sm:$0x1] %v2910
    // Predicated region
    $region42: #{tpu_custom_call.1} parent=1 // pred_check
      _
    $region43: #{tpu_custom_call.1} parent=1 // pred_check_branch
      %2913 = sbr.rel (0) target = $region45
    $region44: #{tpu_custom_call.1} parent=1 // pred_region
      %2915 = vsyncadd [#allocation5], 0
      %s2917 = sshll.u32 [#allocation6], 4
      %s2918 = int_to_ptr.vmem [resolvable:$true] %s2917
      %s2919 = sshll.u32 %s9, 4
      %s2920 = int_to_ptr.hbm [resolvable:$true] %s2919
      %2922 = dma.vmem_to_hbm [thread:$0]  %s2918, 16, %s2920, [#allocation5]
    $region45: #{tpu_custom_call.1} parent=1 // pred_fallthru
      _
    // Predicated region
    $region46: #{tpu_custom_call.1} parent=1 // pred_check
      _
    $region47: #{tpu_custom_call.1} parent=1 // pred_check_branch
      %2924 = sbr.rel (0) target = $region49
    $region48: #{tpu_custom_call.1} parent=1 // pred_region
      %2926 = dma.done [#allocation5], 16
    $region49: #{tpu_custom_call.1} parent=1 // pred_fallthru
      _
    %2927 = vsyncpa [#allocation4], 1
    %2928 = vsyncpa [#allocation5], 1

</llo_original>
